<compile_context>
chip_gen: v6e
topology: v6e:2x2x1
jax: 0.10.0
libtpu: 0.0.40
codegen_flags: <defaults>
</compile_context>

<pallas_src>
import jax
import jax.numpy as jnp
from jax.experimental import pallas as pl
from jax.experimental.pallas import tpu as pltpu


def decoder_kernel(x_ref, w1_ref, b1_ref, w2t_ref, b2_ref, w3s_ref, b3_ref, o_ref):
    # x_ref:   (1, 1, tlK)       expanded input: columns == output columns
    # w1_ref:  (F, 1)    b1_ref: (F, 1)
    # w2t_ref: (2F, F)   b2_ref: (2F, 1)
    # w3s_ref: (K*C_out, 2F)     row k*C_out + o holds W3[:, o, k]
    # b3_ref:  (C_out, 1)
    # o_ref:   (1, C_out, tlK)   lane-dense output block
    x = x_ref[0]                                                   # (1, tlK)

    # layer 1: contraction dim is 1 -> VPU broadcast FMA (skip the MXU)
    h1 = jnp.maximum(w1_ref[...] * x + b1_ref[...], 0.0)           # (F, tlK)

    # layer 2: channel matmul on the MXU
    h2 = jnp.dot(w2t_ref[...], h1, preferred_element_type=jnp.float32)
    h2 = jnp.maximum(h2 + b2_ref[...], 0.0)                        # (2F, tlK)

    # layer 3: single MXU matmul with all K taps stacked along output rows,
    # then a per-lane tap select (output column c uses tap c % K; block lane
    # offsets are multiples of tlK, hence of K, so lane-local iota is exact).
    res = jnp.dot(w3s_ref[...], h2, preferred_element_type=jnp.float32)  # (K*C_out, tlK)

    c_out = b3_ref.shape[0]
    k_taps = w3s_ref.shape[0] // c_out                             # == 4
    n_lanes = o_ref.shape[-1]
    tap = jax.lax.broadcasted_iota(jnp.int32, (1, n_lanes), 1) % k_taps
    acc = jnp.zeros((c_out, n_lanes), jnp.float32)
    for k in range(k_taps):                                        # static, K == 4
        acc = jnp.where(tap == k, res[k * c_out:(k + 1) * c_out, :], acc)
    o_ref[0] = (acc + b3_ref[...]).astype(o_ref.dtype)


def _choose_tile(L, tile_positions, lane_quantum, batch):
    """Pick a position tile: multiple of lane_quantum, prefer a divisor of L,
    and keep >= 2 total grid steps (v7x has 2 TensorCores)."""
    target = max(lane_quantum, min(tile_positions, L))
    target = max(lane_quantum, (target // lane_quantum) * lane_quantum)
    tl = target
    if L % tl != 0:
        d = target
        best = None
        while d >= lane_quantum:
            if L % d == 0:
                best = d
                break
            d -= lane_quantum
        if best is not None and 2 * best >= target:   # don't shrink tiles too much
            tl = best
    if batch * pl.cdiv(L, tl) < 2 and tl >= 2 * lane_quantum:
        tl = max(lane_quantum, (tl // 2 // lane_quantum) * lane_quantum)
    return tl


def decoder_forward(x_ncl, params, *, tile_positions=4096):
    """x_ncl: (B, 1, L) float32.  Returns (B, C_out, 4*L) float32."""
    w1, b1, w2, b2, w3, b3 = params
    B, Cin, L = x_ncl.shape
    assert Cin == 1
    F = w1.shape[1]
    C_out, K = w3.shape[1], w3.shape[2]                   # K == 4 (kernel == stride)

    # position tile: tl*K must be a multiple of 128 lanes
    lane_quantum = max(1, 128 // K)                       # 32 positions for K=4
    tl = _choose_tile(L, tile_positions, lane_quantum, B)
    n_tiles = pl.cdiv(L, tl)
    Lp = n_tiles * tl

    # pad tail positions only when no suitable divisor tile exists (rare);
    # padded tail columns are sliced off afterwards.
    x_pad = x_ncl if Lp == L else jnp.pad(x_ncl, ((0, 0), (0, 0), (0, Lp - L)))
    # expand positions by K so each output column 4*l+k owns its own lane
    # (input is C_out*K times smaller than the output, so this pass is cheap)
    x_exp = jnp.repeat(x_pad, K, axis=-1)                 # (B, 1, Lp*K)

    # channel-major weight layouts (channels on sublanes)
    w1c = jnp.transpose(w1).reshape(F, 1)                 # (F, 1)
    b1c = b1.reshape(F, 1)
    w2t = jnp.transpose(w2)                               # (2F, F)
    b2c = b2.reshape(2 * F, 1)
    w3s = jnp.transpose(w3, (2, 1, 0)).reshape(K * C_out, 2 * F)   # taps stacked on rows
    b3c = b3.reshape(C_out, 1)

    tlK = tl * K
    grid = (B, n_tiles)
    full2 = lambda shape: pl.BlockSpec(shape, lambda b, j: (0, 0))

    flops = 2 * B * Lp * K * (F + F * 2 * F + 2 * F * K * C_out)
    bytes_accessed = 4 * B * Lp * K * (1 + C_out) + 4 * (
        2 * F + 2 * F * F + 2 * F + K * C_out * 2 * F + C_out)

    out = pl.pallas_call(
        decoder_kernel,
        out_shape=jax.ShapeDtypeStruct((B, C_out, Lp * K), jnp.float32),
        grid_spec=pltpu.PrefetchScalarGridSpec(
            num_scalar_prefetch=0,
            grid=grid,
            in_specs=[
                pl.BlockSpec((1, 1, tlK), lambda b, j: (b, 0, j)),   # x (expanded)
                full2((F, 1)),                                       # w1
                full2((F, 1)),                                       # b1
                full2((2 * F, F)),                                   # w2^T
                full2((2 * F, 1)),                                   # b2
                full2((K * C_out, 2 * F)),                           # w3 stacked
                full2((C_out, 1)),                                   # b3
            ],
            out_specs=pl.BlockSpec((1, C_out, tlK), lambda b, j: (b, 0, j)),
        ),
        compiler_params=pltpu.CompilerParams(
            dimension_semantics=("parallel", "parallel")),
        cost_estimate=pl.CostEstimate(flops=flops, transcendentals=0,
                                      bytes_accessed=bytes_accessed),
    )(x_exp, w1c, b1c, w2t, b2c, w3s, b3c)

    # kernel already emits the PyTorch (B, C_out, 4*L) layout; slice only if padded
    return out[:, :, : L * K] if Lp != L else out


def make_params(key, final_output_size, input_channels):
    """Deterministic synthetic parameters, same shapes as the PyTorch module."""
    F = final_output_size
    C_out = input_channels
    ks = jax.random.split(key, 6)
    w1 = jax.random.normal(ks[0], (1, F), jnp.float32) * 0.5             # (in=1, out=F), k=1 squeezed
    b1 = jax.random.normal(ks[1], (F,), jnp.float32) * 0.1
    w2 = jax.random.normal(ks[2], (F, 2 * F), jnp.float32) * 0.3
    b2 = jax.random.normal(ks[3], (2 * F,), jnp.float32) * 0.1
    w3 = jax.random.normal(ks[4], (2 * F, C_out, 4), jnp.float32) * 0.3  # ConvTranspose1d (in, out, k)
    b3 = jax.random.normal(ks[5], (C_out,), jnp.float32) * 0.1
    return (w1, b1, w2, b2, w3, b3)


def decoder_ref(x_ncl, params):
    """Pure-JAX reference of the PyTorch forward (for a correctness check)."""
    w1, b1, w2, b2, w3, b3 = params
    B, _, L = x_ncl.shape
    x = jnp.transpose(x_ncl, (0, 2, 1))                    # (B, L, 1)
    h1 = jnp.maximum(x @ w1 + b1, 0.0)                     # (B, L, F)
    h2 = jnp.maximum(h1 @ w2 + b2, 0.0)                    # (B, L, 2F)
    o = jnp.einsum("bli,iok->blok", h2, w3) + b3[None, None, :, None]
    C_out, K = w3.shape[1], w3.shape[2]
    return jnp.transpose(o, (0, 2, 1, 3)).reshape(B, C_out, L * K)


if __name__ == "__main__":
    key = jax.random.PRNGKey(0)
    k_x, k_x2, k_p = jax.random.split(key, 3)

    input_shape = (4, 32)          # input_shape[0] = 4 output channels for c3
    final_output_size = 8          # F = 8
    params = make_params(k_p, final_output_size, input_shape[0])

    # main run: B=2, L=256 -> tl=256 (divides L, no pad/slice), grid (2, 1), all parallel
    B, L = 2, 256
    x = jax.random.normal(k_x, (B, 1, L), jnp.float32)
    out = jax.block_until_ready(decoder_forward(x, params))
    ref = decoder_ref(x, params)
    assert out.shape == (B, input_shape[0], 4 * L), out.shape
    assert jnp.allclose(out, ref, atol=1e-4, rtol=1e-4)

    # ragged-length run exercising the divisor search + pad/slice fallback
    L2 = 100
    x2 = jax.random.normal(k_x2, (B, 1, L2), jnp.float32)
    out2 = jax.block_until_ready(decoder_forward(x2, params))
    ref2 = decoder_ref(x2, params)
    assert out2.shape == (B, input_shape[0], 4 * L2), out2.shape
    assert jnp.allclose(out2, ref2, atol=1e-4, rtol=1e-4)

    print("KERNEL_OK")
</pallas_src>

<mosaic_0001>
module attributes {stable_mosaic.version = 11 : i64} {
  func.func @decoder_kernel(%arg0: i32, %arg1: i32, %arg2: memref<1x1x1024xf32, #tpu.memory_space<vmem>>, %arg3: memref<8x1xf32, #tpu.memory_space<vmem>>, %arg4: memref<8x1xf32, #tpu.memory_space<vmem>>, %arg5: memref<16x8xf32, #tpu.memory_space<vmem>>, %arg6: memref<16x1xf32, #tpu.memory_space<vmem>>, %arg7: memref<16x16xf32, #tpu.memory_space<vmem>>, %arg8: memref<4x1xf32, #tpu.memory_space<vmem>>, %arg9: memref<1x4x1024xf32, #tpu.memory_space<vmem>>) attributes {dimension_semantics = [#tpu.dimension_semantics<parallel>, #tpu.dimension_semantics<parallel>], iteration_bounds = array<i64: 2, 1>, scalar_prefetch = 0 : i64, scratch_operands = 0 : i64, tpu.core_type = #tpu.core_type<tc>, window_params = [{transform_indices = @transform_0, window_bounds = array<i64: 1, 1, 1024>}, {pipeline_mode = #tpu.pipeline_mode<synchronous>, transform_indices = @transform_1, window_bounds = array<i64: 8, 1>}, {pipeline_mode = #tpu.pipeline_mode<synchronous>, transform_indices = @transform_2, window_bounds = array<i64: 8, 1>}, {pipeline_mode = #tpu.pipeline_mode<synchronous>, transform_indices = @transform_3, window_bounds = array<i64: 16, 8>}, {pipeline_mode = #tpu.pipeline_mode<synchronous>, transform_indices = @transform_4, window_bounds = array<i64: 16, 1>}, {pipeline_mode = #tpu.pipeline_mode<synchronous>, transform_indices = @transform_5, window_bounds = array<i64: 16, 16>}, {pipeline_mode = #tpu.pipeline_mode<synchronous>, transform_indices = @transform_6, window_bounds = array<i64: 4, 1>}, {transform_indices = @transform_7, window_bounds = array<i64: 1, 4, 1024>}]} {
    %c0 = arith.constant 0 : index
    %c0_0 = arith.constant 0 : index
    %c0_1 = arith.constant 0 : index
    %0 = vector.load %arg2[%c0, %c0_0, %c0_1] : memref<1x1x1024xf32, #tpu.memory_space<vmem>>, vector<1x1x1024xf32>
    %1 = vector.shape_cast %0 : vector<1x1x1024xf32> to vector<1x1024xf32>
    %c0_2 = arith.constant 0 : index
    %c0_3 = arith.constant 0 : index
    %2 = vector.load %arg3[%c0_2, %c0_3] : memref<8x1xf32, #tpu.memory_space<vmem>>, vector<8x1xf32>
    %3 = vector.broadcast %2 : vector<8x1xf32> to vector<8x1024xf32>
    %4 = vector.broadcast %1 : vector<1x1024xf32> to vector<8x1024xf32>
    %5 = arith.mulf %3, %4 : vector<8x1024xf32>
    %c0_4 = arith.constant 0 : index
    %c0_5 = arith.constant 0 : index
    %6 = vector.load %arg4[%c0_4, %c0_5] : memref<8x1xf32, #tpu.memory_space<vmem>>, vector<8x1xf32>
    %7 = vector.broadcast %6 : vector<8x1xf32> to vector<8x1024xf32>
    %8 = arith.addf %5, %7 : vector<8x1024xf32>
    %cst = arith.constant 0.000000e+00 : f32
    %9 = vector.broadcast %cst : f32 to vector<8x1024xf32>
    %10 = arith.maximumf %8, %9 : vector<8x1024xf32>
    %c0_6 = arith.constant 0 : index
    %c0_7 = arith.constant 0 : index
    %11 = vector.load %arg5[%c0_6, %c0_7] : memref<16x8xf32, #tpu.memory_space<vmem>>, vector<16x8xf32>
    %cst_8 = arith.constant dense<0.000000e+00> : vector<16x1024xf32>
    %12 = tpu.matmul %11, %10, %cst_8 {dimension_numbers = #tpu.dot_dimension_numbers<[1], [0], [0], [1], [0, 0, 1, 1], [], []>} : vector<16x8xf32>, vector<8x1024xf32>, vector<16x1024xf32> -> vector<16x1024xf32>
    %c0_9 = arith.constant 0 : index
    %c0_10 = arith.constant 0 : index
    %13 = vector.load %arg6[%c0_9, %c0_10] : memref<16x1xf32, #tpu.memory_space<vmem>>, vector<16x1xf32>
    %14 = vector.broadcast %13 : vector<16x1xf32> to vector<16x1024xf32>
    %15 = arith.addf %12, %14 : vector<16x1024xf32>
    %cst_11 = arith.constant 0.000000e+00 : f32
    %16 = vector.broadcast %cst_11 : f32 to vector<16x1024xf32>
    %17 = arith.maximumf %15, %16 : vector<16x1024xf32>
    %c0_12 = arith.constant 0 : index
    %c0_13 = arith.constant 0 : index
    %18 = vector.load %arg7[%c0_12, %c0_13] : memref<16x16xf32, #tpu.memory_space<vmem>>, vector<16x16xf32>
    %cst_14 = arith.constant dense<0.000000e+00> : vector<16x1024xf32>
    %19 = tpu.matmul %18, %17, %cst_14 {dimension_numbers = #tpu.dot_dimension_numbers<[1], [0], [0], [1], [0, 0, 1, 1], [], []>} : vector<16x16xf32>, vector<16x1024xf32>, vector<16x1024xf32> -> vector<16x1024xf32>
    %20 = tpu.iota {dimensions = array<i32: 1>} : vector<1x1024xi32>
    %c4_i32 = arith.constant 4 : i32
    %c0_i32 = arith.constant 0 : i32
    %21 = arith.cmpi eq, %c4_i32, %c0_i32 : i32
    %c1_i32 = arith.constant 1 : i32
    %22 = arith.select %21, %c1_i32, %c4_i32 : i32
    %23 = vector.broadcast %22 : i32 to vector<1x1024xi32>
    %24 = arith.remsi %20, %23 : vector<1x1024xi32>
    %c0_i32_15 = arith.constant 0 : i32
    %25 = vector.broadcast %c0_i32_15 : i32 to vector<1x1024xi32>
    %26 = arith.cmpi ne, %24, %25 : vector<1x1024xi32>
    %c0_i32_16 = arith.constant 0 : i32
    %27 = vector.broadcast %c0_i32_16 : i32 to vector<1x1024xi32>
    %28 = arith.cmpi slt, %24, %27 : vector<1x1024xi32>
    %c0_i32_17 = arith.constant 0 : i32
    %29 = arith.cmpi slt, %22, %c0_i32_17 : i32
    %30 = vector.broadcast %29 : i1 to vector<1x1024xi1>
    %31 = vector.broadcast %30 : vector<1x1024xi1> to vector<1x1024xi1>
    %32 = arith.xori %28, %31 : vector<1x1024xi1>
    %33 = arith.andi %32, %26 : vector<1x1024xi1>
    %34 = vector.broadcast %22 : i32 to vector<1x1024xi32>
    %35 = arith.addi %24, %34 : vector<1x1024xi32>
    %36 = arith.select %33, %35, %24 : vector<1x1024xi1>, vector<1x1024xi32>
    %cst_18 = arith.constant 0.000000e+00 : f32
    %37 = vector.broadcast %cst_18 : f32 to vector<4x1024xf32>
    %c0_i32_19 = arith.constant 0 : i32
    %38 = vector.broadcast %c0_i32_19 : i32 to vector<1x1024xi32>
    %39 = arith.cmpi eq, %36, %38 : vector<1x1024xi32>
    %40 = vector.extract_strided_slice %19 {offsets = [0, 0], sizes = [4, 1024], strides = [1, 1]} : vector<16x1024xf32> to vector<4x1024xf32>
    %41 = vector.shape_cast %39 : vector<1x1024xi1> to vector<1x1024xi1>
    %42 = vector.broadcast %41 : vector<1x1024xi1> to vector<4x1024xi1>
    %43 = arith.select %42, %40, %37 : vector<4x1024xi1>, vector<4x1024xf32>
    %c1_i32_20 = arith.constant 1 : i32
    %44 = vector.broadcast %c1_i32_20 : i32 to vector<1x1024xi32>
    %45 = arith.cmpi eq, %36, %44 : vector<1x1024xi32>
    %46 = vector.extract_strided_slice %19 {offsets = [4, 0], sizes = [4, 1024], strides = [1, 1]} : vector<16x1024xf32> to vector<4x1024xf32>
    %47 = vector.shape_cast %45 : vector<1x1024xi1> to vector<1x1024xi1>
    %48 = vector.broadcast %47 : vector<1x1024xi1> to vector<4x1024xi1>
    %49 = arith.select %48, %46, %43 : vector<4x1024xi1>, vector<4x1024xf32>
    %c2_i32 = arith.constant 2 : i32
    %50 = vector.broadcast %c2_i32 : i32 to vector<1x1024xi32>
    %51 = arith.cmpi eq, %36, %50 : vector<1x1024xi32>
    %52 = vector.extract_strided_slice %19 {offsets = [8, 0], sizes = [4, 1024], strides = [1, 1]} : vector<16x1024xf32> to vector<4x1024xf32>
    %53 = vector.shape_cast %51 : vector<1x1024xi1> to vector<1x1024xi1>
    %54 = vector.broadcast %53 : vector<1x1024xi1> to vector<4x1024xi1>
    %55 = arith.select %54, %52, %49 : vector<4x1024xi1>, vector<4x1024xf32>
    %c3_i32 = arith.constant 3 : i32
    %56 = vector.broadcast %c3_i32 : i32 to vector<1x1024xi32>
    %57 = arith.cmpi eq, %36, %56 : vector<1x1024xi32>
    %58 = vector.extract_strided_slice %19 {offsets = [12, 0], sizes = [4, 1024], strides = [1, 1]} : vector<16x1024xf32> to vector<4x1024xf32>
    %59 = vector.shape_cast %57 : vector<1x1024xi1> to vector<1x1024xi1>
    %60 = vector.broadcast %59 : vector<1x1024xi1> to vector<4x1024xi1>
    %61 = arith.select %60, %58, %55 : vector<4x1024xi1>, vector<4x1024xf32>
    %c0_21 = arith.constant 0 : index
    %c0_22 = arith.constant 0 : index
    %62 = vector.load %arg8[%c0_21, %c0_22] : memref<4x1xf32, #tpu.memory_space<vmem>>, vector<4x1xf32>
    %63 = vector.broadcast %62 : vector<4x1xf32> to vector<4x1024xf32>
    %64 = arith.addf %61, %63 : vector<4x1024xf32>
    %c0_23 = arith.constant 0 : index
    %c0_24 = arith.constant 0 : index
    %c0_25 = arith.constant 0 : index
    %65 = vector.load %arg9[%c0_23, %c0_24, %c0_25] : memref<1x4x1024xf32, #tpu.memory_space<vmem>>, vector<1x4x1024xf32>
    %66 = vector.shape_cast %65 : vector<1x4x1024xf32> to vector<4x1024xf32>
    %67 = vector.shape_cast %64 : vector<4x1024xf32> to vector<1x4x1024xf32>
    tpu.vector_store %arg9[%c0_23, %c0_24, %c0_25], %67 {strides = array<i32>} : memref<1x4x1024xf32, #tpu.memory_space<vmem>>, vector<1x4x1024xf32>,
    return
  }
  func.func @transform_0(%arg0: i32, %arg1: i32) -> (i32, i32, i32) {
    %c0_i32 = arith.constant 0 : i32
    %c0_i32_0 = arith.constant 0 : i32
    return %arg0, %c0_i32, %arg1 : i32, i32, i32
  }
  func.func @transform_1(%arg0: i32, %arg1: i32) -> (i32, i32) {
    %c0_i32 = arith.constant 0 : i32
    %c0_i32_0 = arith.constant 0 : i32
    %c0_i32_1 = arith.constant 0 : i32
    return %c0_i32, %c0_i32_0 : i32, i32
  }
  func.func @transform_2(%arg0: i32, %arg1: i32) -> (i32, i32) {
    %c0_i32 = arith.constant 0 : i32
    %c0_i32_0 = arith.constant 0 : i32
    %c0_i32_1 = arith.constant 0 : i32
    return %c0_i32, %c0_i32_0 : i32, i32
  }
  func.func @transform_3(%arg0: i32, %arg1: i32) -> (i32, i32) {
    %c0_i32 = arith.constant 0 : i32
    %c0_i32_0 = arith.constant 0 : i32
    %c0_i32_1 = arith.constant 0 : i32
    return %c0_i32, %c0_i32_0 : i32, i32
  }
  func.func @transform_4(%arg0: i32, %arg1: i32) -> (i32, i32) {
    %c0_i32 = arith.constant 0 : i32
    %c0_i32_0 = arith.constant 0 : i32
    %c0_i32_1 = arith.constant 0 : i32
    return %c0_i32, %c0_i32_0 : i32, i32
  }
  func.func @transform_5(%arg0: i32, %arg1: i32) -> (i32, i32) {
    %c0_i32 = arith.constant 0 : i32
    %c0_i32_0 = arith.constant 0 : i32
    %c0_i32_1 = arith.constant 0 : i32
    return %c0_i32, %c0_i32_0 : i32, i32
  }
  func.func @transform_6(%arg0: i32, %arg1: i32) -> (i32, i32) {
    %c0_i32 = arith.constant 0 : i32
    %c0_i32_0 = arith.constant 0 : i32
    %c0_i32_1 = arith.constant 0 : i32
    return %c0_i32, %c0_i32_0 : i32, i32
  }
  func.func @transform_7(%arg0: i32, %arg1: i32) -> (i32, i32, i32) {
    %c0_i32 = arith.constant 0 : i32
    %c0_i32_0 = arith.constant 0 : i32
    return %arg0, %c0_i32, %arg1 : i32, i32, i32
  }
}

</mosaic_0001>

<llo_original>
// kernel: tpu_custom_call.1
$region0: #{tpu_custom_call.1}
  #allocation0 [shape = 'u32[]', space=smem, size = 0x4, offset = 0x4, fixed_abs, tag = 'smem constant byte address 0x4 - core index']
  #allocation1 [shape = 'u32[144,128]{1,0:T(1,128)}', space=vmem, size = 0x12000, scoped, tag = 'internal scratch']
  %s0 = inlined_call_operand.vmem [shape: f32[2,1,1024], index: 0, kind: input, shape index: {}]
  %s1 = inlined_call_operand.vmem [shape: f32[8,1], index: 1, kind: input, shape index: {}]
  %s2 = inlined_call_operand.vmem [shape: f32[8,1], index: 2, kind: input, shape index: {}]
  %s3 = inlined_call_operand.vmem [shape: f32[16,8], index: 3, kind: input, shape index: {}]
  %s4 = inlined_call_operand.vmem [shape: f32[16,1], index: 4, kind: input, shape index: {}]
  %s5 = inlined_call_operand.vmem [shape: f32[16,16], index: 5, kind: input, shape index: {}]
  %s6 = inlined_call_operand.vmem [shape: f32[4,1], index: 6, kind: input, shape index: {}]
  %s7 = inlined_call_operand.hbm [shape: f32[2,4,1024], index: 7, kind: output, shape index: {}]
  %s8 = sld [smem:[#allocation0]]
  $region61: #{tpu_custom_call.1} parent=0
    _
  %s10 = ssub.s32 1, %s8
  %s11 = scalar_select 0, %s10, %s8
  $region1: #{tpu_custom_call.1} parent=0
    #allocation2 [shape = 'u8[32768]{0}', space=vmem, size = 0x8000, scoped, tag = 'output window, operand 0']
    #allocation3 [shape = 's32[2]{0}', space=sflag, size = 0x8, scoped, tag = 'scoped memory for tpu_custom_call.1']
    %12 = vsyncpa [#allocation3], 0
    %s13 = scalar_lea.sflag [#allocation3], 1
    %14 = vsyncpa %s13, 0
    loop: start=0, step=1, limit=4
    $region2: #{tpu_custom_call.1} parent=1 // loop_pre_header
      _
    $region3: #{tpu_custom_call.1} parent=1 // loop_header
      %s16 = sphi 0, %s20
      %p17 = scmp.ge.s32.totalorder %s16, 4
      %s23 = sphi 0, %s35
      %s24 = sphi 0, %s31
      %s25 = sphi 0, %s23
      %s26 = sphi 0, %s24
      %s27 = sphi 0, %s25
      %s28 = sphi 0, %s26
      %s40 = sphi 0, %s42
      %s43 = sphi 0, %s40
      %s44 = sphi 0, %s43
      %s60 = sphi 0, %s44
      %s64 = sphi 0, %s64
      %s66 = sphi 0, %s64
      %s67 = sphi 0, %s66
      %s81 = sphi 0, %s67
      %s85 = sphi 0, %s85
      %s87 = sphi 0, %s85
      %s88 = sphi 0, %s87
      %s102 = sphi 0, %s88
      %s106 = sphi 0, %s106
      %s108 = sphi 0, %s106
      %s109 = sphi 0, %s108
      %s123 = sphi 0, %s109
      %s127 = sphi 0, %s127
      %s129 = sphi 0, %s127
      %s130 = sphi 0, %s129
      %s144 = sphi 0, %s130
      %s148 = sphi 0, %s148
      %s150 = sphi 0, %s148
      %s151 = sphi 0, %s150
      %s165 = sphi 0, %s151
      %s169 = sphi 0, %s169
      %s171 = sphi 0, %s169
      %s172 = sphi 0, %s171
      %s186 = sphi 0, %s172
      %s194 = sphi 0, %s196
      %s197 = sphi 0, %s194
      %s198 = sphi 0, %s197
      %s214 = sphi 0, %s198
    $region4: #{tpu_custom_call.1} parent=1 // loop_header_branch
      %19 = sbr.rel (%p17) target = $region8
    $region5: #{tpu_custom_call.1} parent=1 // loop_body
      %s21 = ssub.s32 %s16, 1
      %s22 = ssub.s32 %s16, 2
      %s29 = sadd.s32 1, %s24
      %p30 = scmp.ge.s32.totalorder %s29, 1
      %s31 = scalar_select %p30, 0, %s29
      %s32 = sadd.s32 1, %s23
      %s33 = scalar_select %p30, %s32, %s23
      %p34 = scmp.ge.s32.totalorder %s33, 2
      %s35 = scalar_select %p34, 0, %s33
      %s36 = ssub.s32 %s23, %s35
      %s37 = ssub.s32 %s24, %s31
      %s38 = sor.u32 %s36, %s37
      %p39 = scmp.eq.s32.totalorder %s38, 0
      %s41 = sadd.s32 %s40, 1
      %s42 = scalar_select %p39, %s40, %s41
      %p45 = pneg %p39
      %p46 = scmp.eq.s32.totalorder %s16, 1
      %p47 = por %p45, %p46
      %p48 = scmp.ne.s32.totalorder %s40, %s43
      %p49 = scmp.eq.s32.totalorder %s16, 0
      %p50 = por %p48, %p49
      %p51 = scmp.ne.s32.totalorder %s40, %s43
      %p52 = scmp.eq.s32.totalorder %s21, 1
      %p53 = por %p51, %p52
      %p54 = scmp.ne.s32.totalorder %s43, %s44
      %p55 = scmp.eq.s32.totalorder %s21, 0
      %p56 = por %p54, %p55
      %p57 = scmp.ne.s32.totalorder %s43, %s44
      %p58 = scmp.eq.s32.totalorder %s22, 1
      %p59 = por %p57, %p58
      %p61 = scmp.ne.s32.totalorder %s44, %s60
      %p62 = scmp.eq.s32.totalorder %s22, 0
      %p63 = por %p61, %p62
      %s65 = sadd.s32 %s64, 1
      %p68 = scmp.eq.s32.totalorder %s16, 1
      %p69 = scmp.ne.s32.totalorder %s64, %s66
      %p70 = scmp.eq.s32.totalorder %s16, 0
      %p71 = por %p69, %p70
      %p72 = scmp.ne.s32.totalorder %s64, %s66
      %p73 = scmp.eq.s32.totalorder %s21, 1
      %p74 = por %p72, %p73
      %p75 = scmp.ne.s32.totalorder %s66, %s67
      %p76 = scmp.eq.s32.totalorder %s21, 0
      %p77 = por %p75, %p76
      %p78 = scmp.ne.s32.totalorder %s66, %s67
      %p79 = scmp.eq.s32.totalorder %s22, 1
      %p80 = por %p78, %p79
      %p82 = scmp.ne.s32.totalorder %s67, %s81
      %p83 = scmp.eq.s32.totalorder %s22, 0
      %p84 = por %p82, %p83
      %s86 = sadd.s32 %s85, 1
      %p89 = scmp.eq.s32.totalorder %s16, 1
      %p90 = scmp.ne.s32.totalorder %s85, %s87
      %p91 = scmp.eq.s32.totalorder %s16, 0
      %p92 = por %p90, %p91
      %p93 = scmp.ne.s32.totalorder %s85, %s87
      %p94 = scmp.eq.s32.totalorder %s21, 1
      %p95 = por %p93, %p94
      %p96 = scmp.ne.s32.totalorder %s87, %s88
      %p97 = scmp.eq.s32.totalorder %s21, 0
      %p98 = por %p96, %p97
      %p99 = scmp.ne.s32.totalorder %s87, %s88
      %p100 = scmp.eq.s32.totalorder %s22, 1
      %p101 = por %p99, %p100
      %p103 = scmp.ne.s32.totalorder %s88, %s102
      %p104 = scmp.eq.s32.totalorder %s22, 0
      %p105 = por %p103, %p104
      %s107 = sadd.s32 %s106, 1
      %p110 = scmp.eq.s32.totalorder %s16, 1
      %p111 = scmp.ne.s32.totalorder %s106, %s108
      %p112 = scmp.eq.s32.totalorder %s16, 0
      %p113 = por %p111, %p112
      %p114 = scmp.ne.s32.totalorder %s106, %s108
      %p115 = scmp.eq.s32.totalorder %s21, 1
      %p116 = por %p114, %p115
      %p117 = scmp.ne.s32.totalorder %s108, %s109
      %p118 = scmp.eq.s32.totalorder %s21, 0
      %p119 = por %p117, %p118
      %p120 = scmp.ne.s32.totalorder %s108, %s109
      %p121 = scmp.eq.s32.totalorder %s22, 1
      %p122 = por %p120, %p121
      %p124 = scmp.ne.s32.totalorder %s109, %s123
      %p125 = scmp.eq.s32.totalorder %s22, 0
      %p126 = por %p124, %p125
      %s128 = sadd.s32 %s127, 1
      %p131 = scmp.eq.s32.totalorder %s16, 1
      %p132 = scmp.ne.s32.totalorder %s127, %s129
      %p133 = scmp.eq.s32.totalorder %s16, 0
      %p134 = por %p132, %p133
      %p135 = scmp.ne.s32.totalorder %s127, %s129
      %p136 = scmp.eq.s32.totalorder %s21, 1
      %p137 = por %p135, %p136
      %p138 = scmp.ne.s32.totalorder %s129, %s130
      %p139 = scmp.eq.s32.totalorder %s21, 0
      %p140 = por %p138, %p139
      %p141 = scmp.ne.s32.totalorder %s129, %s130
      %p142 = scmp.eq.s32.totalorder %s22, 1
      %p143 = por %p141, %p142
      %p145 = scmp.ne.s32.totalorder %s130, %s144
      %p146 = scmp.eq.s32.totalorder %s22, 0
      %p147 = por %p145, %p146
      %s149 = sadd.s32 %s148, 1
      %p152 = scmp.eq.s32.totalorder %s16, 1
      %p153 = scmp.ne.s32.totalorder %s148, %s150
      %p154 = scmp.eq.s32.totalorder %s16, 0
      %p155 = por %p153, %p154
      %p156 = scmp.ne.s32.totalorder %s148, %s150
      %p157 = scmp.eq.s32.totalorder %s21, 1
      %p158 = por %p156, %p157
      %p159 = scmp.ne.s32.totalorder %s150, %s151
      %p160 = scmp.eq.s32.totalorder %s21, 0
      %p161 = por %p159, %p160
      %p162 = scmp.ne.s32.totalorder %s150, %s151
      %p163 = scmp.eq.s32.totalorder %s22, 1
      %p164 = por %p162, %p163
      %p166 = scmp.ne.s32.totalorder %s151, %s165
      %p167 = scmp.eq.s32.totalorder %s22, 0
      %p168 = por %p166, %p167
      %s170 = sadd.s32 %s169, 1
      %p173 = scmp.eq.s32.totalorder %s16, 1
      %p174 = scmp.ne.s32.totalorder %s169, %s171
      %p175 = scmp.eq.s32.totalorder %s16, 0
      %p176 = por %p174, %p175
      %p177 = scmp.ne.s32.totalorder %s169, %s171
      %p178 = scmp.eq.s32.totalorder %s21, 1
      %p179 = por %p177, %p178
      %p180 = scmp.ne.s32.totalorder %s171, %s172
      %p181 = scmp.eq.s32.totalorder %s21, 0
      %p182 = por %p180, %p181
      %p183 = scmp.ne.s32.totalorder %s171, %s172
      %p184 = scmp.eq.s32.totalorder %s22, 1
      %p185 = por %p183, %p184
      %p187 = scmp.ne.s32.totalorder %s172, %s186
      %p188 = scmp.eq.s32.totalorder %s22, 0
      %p189 = por %p187, %p188
      %s190 = ssub.s32 %s23, %s35
      %s191 = ssub.s32 %s24, %s31
      %s192 = sor.u32 %s190, %s191
      %p193 = scmp.eq.s32.totalorder %s192, 0
      %s195 = sadd.s32 %s194, 1
      %s196 = scalar_select %p193, %s194, %s195
      %p199 = pneg %p193
      %p200 = scmp.eq.s32.totalorder %s16, 1
      %p201 = por %p199, %p200
      %p202 = scmp.ne.s32.totalorder %s194, %s197
      %p203 = scmp.eq.s32.totalorder %s16, 0
      %p204 = por %p202, %p203
      %p205 = scmp.ne.s32.totalorder %s194, %s197
      %p206 = scmp.eq.s32.totalorder %s21, 1
      %p207 = por %p205, %p206
      %p208 = scmp.ne.s32.totalorder %s197, %s198
      %p209 = scmp.eq.s32.totalorder %s21, 0
      %p210 = por %p208, %p209
      %p211 = scmp.ne.s32.totalorder %s197, %s198
      %p212 = scmp.eq.s32.totalorder %s22, 1
      %p213 = por %p211, %p212
      %p215 = scmp.ne.s32.totalorder %s198, %s214
      %p216 = scmp.eq.s32.totalorder %s22, 0
      %p217 = por %p215, %p216
      %p218 = scmp.le.s32.totalorder 1, %s16
      %p219 = scmp.lt.s32.totalorder %s16, 3
      %p220 = pnand %p218, %p219
      %p221 = pneg %p220
      // Predicated region
      $region9: #{tpu_custom_call.1} parent=5 // pred_check
        _
      $region10: #{tpu_custom_call.1} parent=5 // pred_check_branch
        %223 = sbr.rel (%p220) target = $region12
      $region11: #{tpu_custom_call.1} parent=5 // pred_region
        %s224 = ssub.s32 %s16, 1
        // Predicated region
        $region13: #{tpu_custom_call.1} parent=11 // pred_check
          %p225 = pneg %p77
        $region14: #{tpu_custom_call.1} parent=11 // pred_check_branch
          %227 = sbr.rel (%p225) target = $region16
        $region15: #{tpu_custom_call.1} parent=11 // pred_region
          _
        $region16: #{tpu_custom_call.1} parent=11 // pred_fallthru
          _
        // Predicated region
        $region17: #{tpu_custom_call.1} parent=11 // pred_check
          %p228 = pneg %p98
        $region18: #{tpu_custom_call.1} parent=11 // pred_check_branch
          %230 = sbr.rel (%p228) target = $region20
        $region19: #{tpu_custom_call.1} parent=11 // pred_region
          _
        $region20: #{tpu_custom_call.1} parent=11 // pred_fallthru
          _
        // Predicated region
        $region21: #{tpu_custom_call.1} parent=11 // pred_check
          %p231 = pneg %p119
        $region22: #{tpu_custom_call.1} parent=11 // pred_check_branch
          %233 = sbr.rel (%p231) target = $region24
        $region23: #{tpu_custom_call.1} parent=11 // pred_region
          _
        $region24: #{tpu_custom_call.1} parent=11 // pred_fallthru
          _
        // Predicated region
        $region25: #{tpu_custom_call.1} parent=11 // pred_check
          %p234 = pneg %p140
        $region26: #{tpu_custom_call.1} parent=11 // pred_check_branch
          %236 = sbr.rel (%p234) target = $region28
        $region27: #{tpu_custom_call.1} parent=11 // pred_region
          _
        $region28: #{tpu_custom_call.1} parent=11 // pred_fallthru
          _
        // Predicated region
        $region29: #{tpu_custom_call.1} parent=11 // pred_check
          %p237 = pneg %p161
        $region30: #{tpu_custom_call.1} parent=11 // pred_check_branch
          %239 = sbr.rel (%p237) target = $region32
        $region31: #{tpu_custom_call.1} parent=11 // pred_region
          _
        $region32: #{tpu_custom_call.1} parent=11 // pred_fallthru
          _
        // Predicated region
        $region33: #{tpu_custom_call.1} parent=11 // pred_check
          %p240 = pneg %p182
        $region34: #{tpu_custom_call.1} parent=11 // pred_check_branch
          %242 = sbr.rel (%p240) target = $region36
        $region35: #{tpu_custom_call.1} parent=11 // pred_region
          _
        $region36: #{tpu_custom_call.1} parent=11 // pred_fallthru
          _
      $region12: #{tpu_custom_call.1} parent=5 // pred_fallthru
        _
      %p243 = scmp.lt.s32.totalorder %s16, 2
      // Predicated region
      $region37: #{tpu_custom_call.1} parent=5 // pred_check
        %p244 = pneg %p243
      $region38: #{tpu_custom_call.1} parent=5 // pred_check_branch
        %246 = sbr.rel (%p244) target = $region40
      $region39: #{tpu_custom_call.1} parent=5 // pred_region
        // Predicated region
        $region41: #{tpu_custom_call.1} parent=39 // pred_check
          %p247 = pneg %p50
        $region42: #{tpu_custom_call.1} parent=39 // pred_check_branch
          %249 = sbr.rel (%p247) target = $region44
        $region43: #{tpu_custom_call.1} parent=39 // pred_region
          %s250 = smul.u32 8, %s24
          %p251 = scmp.lt.s32.totalorder %s23, 1
          %s252 = scalar_select %p251, %s23, 1
          %p253 = scmp.lt.s32.totalorder %s250, 7
          %s254 = scalar_select %p253, %s250, 7
          %s255 = smul.addr %s252, 8
          %s256 = sadd.s32 %s254, %s255
          %s257 = scalar_lea.vmem %s0, %s256
          %s258 = smul.u32 8, %s24
        $region44: #{tpu_custom_call.1} parent=39 // pred_fallthru
          _
      $region40: #{tpu_custom_call.1} parent=5 // pred_fallthru
        _
      %p259 = scmp.le.s32.totalorder 1, %s16
      %p260 = scmp.lt.s32.totalorder %s16, 3
      %p261 = pnand %p259, %p260
      %p262 = pneg %p261
      // Predicated region
      $region45: #{tpu_custom_call.1} parent=5 // pred_check
        _
      $region46: #{tpu_custom_call.1} parent=5 // pred_check_branch
        %264 = sbr.rel (%p261) target = $region48
      $region47: #{tpu_custom_call.1} parent=5 // pred_region
        %s265 = ssub.s32 %s16, 1
        %s266 = smul.u32 8, %s26
        %p267 = scmp.lt.s32.totalorder %s25, 1
        %s268 = scalar_select %p267, %s25, 1
        %p269 = scmp.lt.s32.totalorder %s266, 7
        %s270 = scalar_select %p269, %s266, 7
        %s271 = smul.addr %s268, 8
        %s272 = sadd.s32 %s270, %s271
        %s273 = scalar_lea.vmem %s0, %s272
        %p274 = pneg %p56
        %p275 = pneg %p53
        %p276 = pneg %p77
        %p277 = pneg %p74
        %p278 = pneg %p98
        %p279 = pneg %p95
        %p280 = pneg %p119
        %p281 = pneg %p116
        %p282 = pneg %p140
        %p283 = pneg %p137
        %p284 = pneg %p161
        %p285 = pneg %p158
        %p286 = pneg %p182
        %p287 = pneg %p179
        %p288 = pneg %p210
        %p289 = pneg %p207
        %s290 = sand.u32 %s197, 1
        %s291 = scalar_lea.sflag [#allocation3], %s290
        %s292 = sand.u32 %s197, 1
        %s293 = smul.addr %s292, 32
        %s294 = scalar_lea.vmem [#allocation2], %s293
        %s295 = smul.u32 8, %s26
        %p296 = scmp.lt.s32.totalorder %s25, 1
        %s297 = scalar_select %p296, %s25, 1
        %p298 = scmp.lt.s32.totalorder %s295, 7
        %s299 = scalar_select %p298, %s295, 7
        %s300 = smul.addr %s297, 8
        %s301 = sadd.s32 %s299, %s300
        %s302 = scalar_lea.vmem %s0, %s301
        %s303 = smul.u32 8, %s26
        %s304 = smul.u32 8, %s26
        %v305 = vld [vmem:[%s302] sm:$0xff]
        %v306 = vld [vmem:[%s1] sm:$0xff]
        %308 = vset.pattern.permute.xlu0 0
        %309 = vperm.xlu0 %308, %v306
        %v310 = vpop.permute.xlu0 %309
        %v313 = vlaneseq
        %v314 = vshrl.u32 %v313, 7
        %v315 = vsub.s32 0, %v314
        %v316 = vrot.slane %v305, %v315
        %v317 = vlaneseq
        %v318 = vshrl.u32 %v317, 7
        %v319 = vsub.s32 1, %v318
        %v320 = vrot.slane %v305, %v319
        %v321 = vlaneseq
        %v322 = vshrl.u32 %v321, 7
        %v323 = vsub.s32 2, %v322
        %v324 = vrot.slane %v305, %v323
        %v325 = vlaneseq
        %v326 = vshrl.u32 %v325, 7
        %v327 = vsub.s32 3, %v326
        %v328 = vrot.slane %v305, %v327
        %v329 = vlaneseq
        %v330 = vshrl.u32 %v329, 7
        %v331 = vsub.s32 4, %v330
        %v332 = vrot.slane %v305, %v331
        %v333 = vlaneseq
        %v334 = vshrl.u32 %v333, 7
        %v335 = vsub.s32 5, %v334
        %v336 = vrot.slane %v305, %v335
        %v337 = vlaneseq
        %v338 = vshrl.u32 %v337, 7
        %v339 = vsub.s32 6, %v338
        %v340 = vrot.slane %v305, %v339
        %v341 = vlaneseq
        %v342 = vshrl.u32 %v341, 7
        %v343 = vsub.s32 7, %v342
        %v344 = vrot.slane %v305, %v343
        %v353 = vmul.f32 %v310, %v316
        %v354 = vmul.f32 %v310, %v320
        %v355 = vmul.f32 %v310, %v324
        %v356 = vmul.f32 %v310, %v328
        %v357 = vmul.f32 %v310, %v332
        %v358 = vmul.f32 %v310, %v336
        %v359 = vmul.f32 %v310, %v340
        %v360 = vmul.f32 %v310, %v344
        %v361 = vld [vmem:[%s2] sm:$0xff]
        %363 = vset.pattern.permute.xlu0 0
        %364 = vperm.xlu0 %363, %v361
        %v365 = vpop.permute.xlu0 %364
        %v367 = vadd.f32 %v353, %v365
        %v368 = vadd.f32 %v354, %v365
        %v369 = vadd.f32 %v355, %v365
        %v370 = vadd.f32 %v356, %v365
        %v371 = vadd.f32 %v357, %v365
        %v372 = vadd.f32 %v358, %v365
        %v373 = vadd.f32 %v359, %v365
        %v374 = vadd.f32 %v360, %v365
        %v375 = vmax.f32 %v367, 0.0
        %v376 = vmax.f32 %v368, 0.0
        %v377 = vmax.f32 %v369, 0.0
        %v378 = vmax.f32 %v370, 0.0
        %v379 = vmax.f32 %v371, 0.0
        %v380 = vmax.f32 %v372, 0.0
        %v381 = vmax.f32 %v373, 0.0
        %v382 = vmax.f32 %v374, 0.0
        %v383 = vld [vmem:[%s3] sm:$0xff]
        %v384 = vld [vmem:[%s3 + $0x8] sm:$0xff]
        %v385 = vld [vmem:[%s4] sm:$0xff]
        %v386 = vld [vmem:[%s4 + $0x8] sm:$0xff]
        %388 = vset.pattern.permute.xlu0 0
        %389 = vperm.xlu0 %388, %v385
        %v390 = vpop.permute.xlu0 %389
        %393 = vset.pattern.permute.xlu0 0
        %394 = vperm.xlu0 %393, %v386
        %v395 = vpop.permute.xlu0 %394
        %vm397 = vcmask 64512
        %v399 = vsel %vm397, %v383, 0
        %v402 = vsel %vm397, %v384, 0
        %404 = vmatprep.subr.mxu0 0.0
        %405 = vmatpush1.msra.mxu0 0.0
        %406 = vmatprep.subr.mxu0 0.0
        %407 = vmatpush1.msra.mxu0 0.0
        %408 = vmatprep.subr.mxu0 0.0
        %409 = vmatpush1.msra.mxu0 0.0
        %410 = vmatprep.subr.mxu0 0.0
        %411 = vmatpush1.msra.mxu0 0.0
        %412 = vmatprep.subr.mxu0 0.0
        %413 = vmatpush1.msra.mxu0 0.0
        %414 = vmatprep.subr.mxu0 0.0
        %415 = vmatpush1.msra.mxu0 0.0
        %416 = vmatprep.subr.mxu0 0.0
        %417 = vmatpush1.msra.mxu0 0.0
        %418 = vmatprep.subr.mxu0 0.0
        %419 = vmatpush1.msra.mxu0 0.0
        %420 = vmatprep.subr.mxu0 0.0
        %421 = vmatpush1.msra.mxu0 0.0
        %422 = vmatprep.subr.mxu0 0.0
        %423 = vmatpush1.msra.mxu0 0.0
        %424 = vmatprep.subr.mxu0 0.0
        %425 = vmatpush1.msra.mxu0 0.0
        %426 = vmatprep.subr.mxu0 0.0
        %427 = vmatpush1.msra.mxu0 0.0
        %428 = vmatprep.subr.mxu0 0.0
        %429 = vmatpush1.msra.mxu0 0.0
        %430 = vmatprep.subr.mxu0 0.0
        %431 = vmatpush1.msra.mxu0 0.0
        %432 = vmatprep.subr.mxu0 0.0
        %433 = vmatpush1.msra.mxu0 0.0
        %434 = vmatprep.subr.mxu0 %v376
        %435 = vmatpush1.msra.mxu0 %v375
        %436 = vmatprep.subr.mxu0 0.0
        %437 = vmatpush2.msra.mxu0 0.0
        %438 = vmatprep.subr.mxu0 0.0
        %439 = vmatpush2.msra.mxu0 0.0
        %440 = vmatprep.subr.mxu0 0.0
        %441 = vmatpush2.msra.mxu0 0.0
        %442 = vmatprep.subr.mxu0 0.0
        %443 = vmatpush2.msra.mxu0 0.0
        %444 = vmatprep.subr.mxu0 0.0
        %445 = vmatpush2.msra.mxu0 0.0
        %446 = vmatprep.subr.mxu0 0.0
        %447 = vmatpush2.msra.mxu0 0.0
        %448 = vmatprep.subr.mxu0 0.0
        %449 = vmatpush2.msra.mxu0 0.0
        %450 = vmatprep.subr.mxu0 0.0
        %451 = vmatpush2.msra.mxu0 0.0
        %452 = vmatprep.subr.mxu0 0.0
        %453 = vmatpush2.msra.mxu0 0.0
        %454 = vmatprep.subr.mxu0 0.0
        %455 = vmatpush2.msra.mxu0 0.0
        %456 = vmatprep.subr.mxu0 0.0
        %457 = vmatpush2.msra.mxu0 0.0
        %458 = vmatprep.subr.mxu0 0.0
        %459 = vmatpush2.msra.mxu0 0.0
        %460 = vmatprep.subr.mxu0 0.0
        %461 = vmatpush2.msra.mxu0 0.0
        %462 = vmatprep.subr.mxu0 0.0
        %463 = vmatpush2.msra.mxu0 0.0
        %464 = vmatprep.subr.mxu0 0.0
        %465 = vmatpush2.msra.mxu0 0.0
        %466 = vmatprep.subr.mxu0 0.0
        %467 = vmatpush2.msra.mxu0 0.0
        %468 = vmatprep.mubr.f32.mxu0 0.0
        %469 = vmatmul.mubr.f32.gmra.mxu0 %v399
        %v470 = vpop.f32.mrf.mxu0
        %v471 = vadd.f32 %v390, %v470
        %v472 = vpop.f32.mrf.mxu0
        %v473 = vadd.f32 %v390, %v472
        %474 = vmatprep.mubr.f32.mxu0 0.0
        %475 = vmatmul.mubr.f32.gmra.mxu0 %v402
        %v476 = vpop.f32.mrf.mxu0
        %v477 = vadd.f32 %v395, %v476
        %v478 = vpop.f32.mrf.mxu0
        %v479 = vadd.f32 %v395, %v478
        %480 = vdwg.mxu0
        %481 = vmatprep.subr.mxu0 0.0
        %482 = vmatpush1.msra.mxu0 0.0
        %483 = vmatprep.subr.mxu0 0.0
        %484 = vmatpush1.msra.mxu0 0.0
        %485 = vmatprep.subr.mxu0 0.0
        %486 = vmatpush1.msra.mxu0 0.0
        %487 = vmatprep.subr.mxu0 0.0
        %488 = vmatpush1.msra.mxu0 0.0
        %489 = vmatprep.subr.mxu0 0.0
        %490 = vmatpush1.msra.mxu0 0.0
        %491 = vmatprep.subr.mxu0 0.0
        %492 = vmatpush1.msra.mxu0 0.0
        %493 = vmatprep.subr.mxu0 0.0
        %494 = vmatpush1.msra.mxu0 0.0
        %495 = vmatprep.subr.mxu0 0.0
        %496 = vmatpush1.msra.mxu0 0.0
        %497 = vmatprep.subr.mxu0 0.0
        %498 = vmatpush1.msra.mxu0 0.0
        %499 = vmatprep.subr.mxu0 0.0
        %500 = vmatpush1.msra.mxu0 0.0
        %501 = vmatprep.subr.mxu0 0.0
        %502 = vmatpush1.msra.mxu0 0.0
        %503 = vmatprep.subr.mxu0 0.0
        %504 = vmatpush1.msra.mxu0 0.0
        %505 = vmatprep.subr.mxu0 0.0
        %506 = vmatpush1.msra.mxu0 0.0
        %507 = vmatprep.subr.mxu0 0.0
        %508 = vmatpush1.msra.mxu0 0.0
        %509 = vmatprep.subr.mxu0 0.0
        %510 = vmatpush1.msra.mxu0 0.0
        %511 = vmatprep.subr.mxu0 %v378
        %512 = vmatpush1.msra.mxu0 %v377
        %513 = vmatprep.subr.mxu0 0.0
        %514 = vmatpush2.msra.mxu0 0.0
        %515 = vmatprep.subr.mxu0 0.0
        %516 = vmatpush2.msra.mxu0 0.0
        %517 = vmatprep.subr.mxu0 0.0
        %518 = vmatpush2.msra.mxu0 0.0
        %519 = vmatprep.subr.mxu0 0.0
        %520 = vmatpush2.msra.mxu0 0.0
        %521 = vmatprep.subr.mxu0 0.0
        %522 = vmatpush2.msra.mxu0 0.0
        %523 = vmatprep.subr.mxu0 0.0
        %524 = vmatpush2.msra.mxu0 0.0
        %525 = vmatprep.subr.mxu0 0.0
        %526 = vmatpush2.msra.mxu0 0.0
        %527 = vmatprep.subr.mxu0 0.0
        %528 = vmatpush2.msra.mxu0 0.0
        %529 = vmatprep.subr.mxu0 0.0
        %530 = vmatpush2.msra.mxu0 0.0
        %531 = vmatprep.subr.mxu0 0.0
        %532 = vmatpush2.msra.mxu0 0.0
        %533 = vmatprep.subr.mxu0 0.0
        %534 = vmatpush2.msra.mxu0 0.0
        %535 = vmatprep.subr.mxu0 0.0
        %536 = vmatpush2.msra.mxu0 0.0
        %537 = vmatprep.subr.mxu0 0.0
        %538 = vmatpush2.msra.mxu0 0.0
        %539 = vmatprep.subr.mxu0 0.0
        %540 = vmatpush2.msra.mxu0 0.0
        %541 = vmatprep.subr.mxu0 0.0
        %542 = vmatpush2.msra.mxu0 0.0
        %543 = vmatprep.subr.mxu0 0.0
        %544 = vmatpush2.msra.mxu0 0.0
        %545 = vmatprep.mubr.f32.mxu0 0.0
        %546 = vmatmul.mubr.f32.gmra.mxu0 %v399
        %v547 = vpop.f32.mrf.mxu0
        %v548 = vadd.f32 %v390, %v547
        %v549 = vpop.f32.mrf.mxu0
        %v550 = vadd.f32 %v390, %v549
        %551 = vmatprep.mubr.f32.mxu0 0.0
        %552 = vmatmul.mubr.f32.gmra.mxu0 %v402
        %v553 = vpop.f32.mrf.mxu0
        %v554 = vadd.f32 %v395, %v553
        %v555 = vpop.f32.mrf.mxu0
        %v556 = vadd.f32 %v395, %v555
        %557 = vdwg.mxu0
        %558 = vmatprep.subr.mxu0 0.0
        %559 = vmatpush1.msra.mxu0 0.0
        %560 = vmatprep.subr.mxu0 0.0
        %561 = vmatpush1.msra.mxu0 0.0
        %562 = vmatprep.subr.mxu0 0.0
        %563 = vmatpush1.msra.mxu0 0.0
        %564 = vmatprep.subr.mxu0 0.0
        %565 = vmatpush1.msra.mxu0 0.0
        %566 = vmatprep.subr.mxu0 0.0
        %567 = vmatpush1.msra.mxu0 0.0
        %568 = vmatprep.subr.mxu0 0.0
        %569 = vmatpush1.msra.mxu0 0.0
        %570 = vmatprep.subr.mxu0 0.0
        %571 = vmatpush1.msra.mxu0 0.0
        %572 = vmatprep.subr.mxu0 0.0
        %573 = vmatpush1.msra.mxu0 0.0
        %574 = vmatprep.subr.mxu0 0.0
        %575 = vmatpush1.msra.mxu0 0.0
        %576 = vmatprep.subr.mxu0 0.0
        %577 = vmatpush1.msra.mxu0 0.0
        %578 = vmatprep.subr.mxu0 0.0
        %579 = vmatpush1.msra.mxu0 0.0
        %580 = vmatprep.subr.mxu0 0.0
        %581 = vmatpush1.msra.mxu0 0.0
        %582 = vmatprep.subr.mxu0 0.0
        %583 = vmatpush1.msra.mxu0 0.0
        %584 = vmatprep.subr.mxu0 0.0
        %585 = vmatpush1.msra.mxu0 0.0
        %586 = vmatprep.subr.mxu0 0.0
        %587 = vmatpush1.msra.mxu0 0.0
        %588 = vmatprep.subr.mxu0 %v380
        %589 = vmatpush1.msra.mxu0 %v379
        %590 = vmatprep.subr.mxu0 0.0
        %591 = vmatpush2.msra.mxu0 0.0
        %592 = vmatprep.subr.mxu0 0.0
        %593 = vmatpush2.msra.mxu0 0.0
        %594 = vmatprep.subr.mxu0 0.0
        %595 = vmatpush2.msra.mxu0 0.0
        %596 = vmatprep.subr.mxu0 0.0
        %597 = vmatpush2.msra.mxu0 0.0
        %598 = vmatprep.subr.mxu0 0.0
        %599 = vmatpush2.msra.mxu0 0.0
        %600 = vmatprep.subr.mxu0 0.0
        %601 = vmatpush2.msra.mxu0 0.0
        %602 = vmatprep.subr.mxu0 0.0
        %603 = vmatpush2.msra.mxu0 0.0
        %604 = vmatprep.subr.mxu0 0.0
        %605 = vmatpush2.msra.mxu0 0.0
        %606 = vmatprep.subr.mxu0 0.0
        %607 = vmatpush2.msra.mxu0 0.0
        %608 = vmatprep.subr.mxu0 0.0
        %609 = vmatpush2.msra.mxu0 0.0
        %610 = vmatprep.subr.mxu0 0.0
        %611 = vmatpush2.msra.mxu0 0.0
        %612 = vmatprep.subr.mxu0 0.0
        %613 = vmatpush2.msra.mxu0 0.0
        %614 = vmatprep.subr.mxu0 0.0
        %615 = vmatpush2.msra.mxu0 0.0
        %616 = vmatprep.subr.mxu0 0.0
        %617 = vmatpush2.msra.mxu0 0.0
        %618 = vmatprep.subr.mxu0 0.0
        %619 = vmatpush2.msra.mxu0 0.0
        %620 = vmatprep.subr.mxu0 0.0
        %621 = vmatpush2.msra.mxu0 0.0
        %622 = vmatprep.mubr.f32.mxu0 0.0
        %623 = vmatmul.mubr.f32.gmra.mxu0 %v399
        %v624 = vpop.f32.mrf.mxu0
        %v625 = vadd.f32 %v390, %v624
        %v626 = vpop.f32.mrf.mxu0
        %v627 = vadd.f32 %v390, %v626
        %628 = vmatprep.mubr.f32.mxu0 0.0
        %629 = vmatmul.mubr.f32.gmra.mxu0 %v402
        %v630 = vpop.f32.mrf.mxu0
        %v631 = vadd.f32 %v395, %v630
        %v632 = vpop.f32.mrf.mxu0
        %v633 = vadd.f32 %v395, %v632
        %634 = vdwg.mxu0
        %635 = vmatprep.subr.mxu0 0.0
        %636 = vmatpush1.msra.mxu0 0.0
        %637 = vmatprep.subr.mxu0 0.0
        %638 = vmatpush1.msra.mxu0 0.0
        %639 = vmatprep.subr.mxu0 0.0
        %640 = vmatpush1.msra.mxu0 0.0
        %641 = vmatprep.subr.mxu0 0.0
        %642 = vmatpush1.msra.mxu0 0.0
        %643 = vmatprep.subr.mxu0 0.0
        %644 = vmatpush1.msra.mxu0 0.0
        %645 = vmatprep.subr.mxu0 0.0
        %646 = vmatpush1.msra.mxu0 0.0
        %647 = vmatprep.subr.mxu0 0.0
        %648 = vmatpush1.msra.mxu0 0.0
        %649 = vmatprep.subr.mxu0 0.0
        %650 = vmatpush1.msra.mxu0 0.0
        %651 = vmatprep.subr.mxu0 0.0
        %652 = vmatpush1.msra.mxu0 0.0
        %653 = vmatprep.subr.mxu0 0.0
        %654 = vmatpush1.msra.mxu0 0.0
        %655 = vmatprep.subr.mxu0 0.0
        %656 = vmatpush1.msra.mxu0 0.0
        %657 = vmatprep.subr.mxu0 0.0
        %658 = vmatpush1.msra.mxu0 0.0
        %659 = vmatprep.subr.mxu0 0.0
        %660 = vmatpush1.msra.mxu0 0.0
        %661 = vmatprep.subr.mxu0 0.0
        %662 = vmatpush1.msra.mxu0 0.0
        %663 = vmatprep.subr.mxu0 0.0
        %664 = vmatpush1.msra.mxu0 0.0
        %665 = vmatprep.subr.mxu0 %v382
        %666 = vmatpush1.msra.mxu0 %v381
        %667 = vmatprep.subr.mxu0 0.0
        %668 = vmatpush2.msra.mxu0 0.0
        %669 = vmatprep.subr.mxu0 0.0
        %670 = vmatpush2.msra.mxu0 0.0
        %671 = vmatprep.subr.mxu0 0.0
        %672 = vmatpush2.msra.mxu0 0.0
        %673 = vmatprep.subr.mxu0 0.0
        %674 = vmatpush2.msra.mxu0 0.0
        %675 = vmatprep.subr.mxu0 0.0
        %676 = vmatpush2.msra.mxu0 0.0
        %677 = vmatprep.subr.mxu0 0.0
        %678 = vmatpush2.msra.mxu0 0.0
        %679 = vmatprep.subr.mxu0 0.0
        %680 = vmatpush2.msra.mxu0 0.0
        %681 = vmatprep.subr.mxu0 0.0
        %682 = vmatpush2.msra.mxu0 0.0
        %683 = vmatprep.subr.mxu0 0.0
        %684 = vmatpush2.msra.mxu0 0.0
        %685 = vmatprep.subr.mxu0 0.0
        %686 = vmatpush2.msra.mxu0 0.0
        %687 = vmatprep.subr.mxu0 0.0
        %688 = vmatpush2.msra.mxu0 0.0
        %689 = vmatprep.subr.mxu0 0.0
        %690 = vmatpush2.msra.mxu0 0.0
        %691 = vmatprep.subr.mxu0 0.0
        %692 = vmatpush2.msra.mxu0 0.0
        %693 = vmatprep.subr.mxu0 0.0
        %694 = vmatpush2.msra.mxu0 0.0
        %695 = vmatprep.subr.mxu0 0.0
        %696 = vmatpush2.msra.mxu0 0.0
        %697 = vmatprep.subr.mxu0 0.0
        %698 = vmatpush2.msra.mxu0 0.0
        %699 = vmatprep.mubr.f32.mxu0 0.0
        %700 = vmatmul.mubr.f32.gmra.mxu0 %v399
        %v701 = vpop.f32.mrf.mxu0
        %v702 = vadd.f32 %v390, %v701
        %v703 = vpop.f32.mrf.mxu0
        %v704 = vadd.f32 %v390, %v703
        %705 = vmatprep.mubr.f32.mxu0 0.0
        %706 = vmatmul.mubr.f32.gmra.mxu0 %v402
        %v707 = vpop.f32.mrf.mxu0
        %v708 = vadd.f32 %v395, %v707
        %v709 = vpop.f32.mrf.mxu0
        %v710 = vadd.f32 %v395, %v709
        %711 = vdwg.mxu0
        %v712 = vmax.f32 %v471, 0.0
        %v713 = vmax.f32 %v473, 0.0
        %v714 = vmax.f32 %v548, 0.0
        %v715 = vmax.f32 %v550, 0.0
        %v716 = vmax.f32 %v625, 0.0
        %v717 = vmax.f32 %v627, 0.0
        %v718 = vmax.f32 %v702, 0.0
        %v719 = vmax.f32 %v704, 0.0
        %v720 = vmax.f32 %v477, 0.0
        %v721 = vmax.f32 %v479, 0.0
        %v722 = vmax.f32 %v554, 0.0
        %v723 = vmax.f32 %v556, 0.0
        %v724 = vmax.f32 %v631, 0.0
        %v725 = vmax.f32 %v633, 0.0
        %v726 = vmax.f32 %v708, 0.0
        %v727 = vmax.f32 %v710, 0.0
        %v728 = vld [vmem:[%s5] sm:$0xff]
        %v729 = vld [vmem:[%s5 + $0x8] sm:$0xff]
        %vm730 = vcmask 130048
        %v732 = vsel %vm730, %v728, 0
        %v735 = vsel %vm730, %v729, 0
        %737 = vmatprep.subr.mxu0 0.0
        %738 = vmatpush1.msra.mxu0 0.0
        %739 = vmatprep.subr.mxu0 0.0
        %740 = vmatpush1.msra.mxu0 0.0
        %741 = vmatprep.subr.mxu0 0.0
        %742 = vmatpush1.msra.mxu0 0.0
        %743 = vmatprep.subr.mxu0 0.0
        %744 = vmatpush1.msra.mxu0 0.0
        %745 = vmatprep.subr.mxu0 0.0
        %746 = vmatpush1.msra.mxu0 0.0
        %747 = vmatprep.subr.mxu0 0.0
        %748 = vmatpush1.msra.mxu0 0.0
        %749 = vmatprep.subr.mxu0 0.0
        %750 = vmatpush1.msra.mxu0 0.0
        %751 = vmatprep.subr.mxu0 0.0
        %752 = vmatpush1.msra.mxu0 0.0
        %753 = vmatprep.subr.mxu0 0.0
        %754 = vmatpush1.msra.mxu0 0.0
        %755 = vmatprep.subr.mxu0 0.0
        %756 = vmatpush1.msra.mxu0 0.0
        %757 = vmatprep.subr.mxu0 0.0
        %758 = vmatpush1.msra.mxu0 0.0
        %759 = vmatprep.subr.mxu0 0.0
        %760 = vmatpush1.msra.mxu0 0.0
        %761 = vmatprep.subr.mxu0 0.0
        %762 = vmatpush1.msra.mxu0 0.0
        %763 = vmatprep.subr.mxu0 0.0
        %764 = vmatpush1.msra.mxu0 0.0
        %765 = vmatprep.subr.mxu0 %v721
        %766 = vmatpush1.msra.mxu0 %v720
        %767 = vmatprep.subr.mxu0 %v713
        %768 = vmatpush1.msra.mxu0 %v712
        %769 = vmatprep.subr.mxu0 0.0
        %770 = vmatpush2.msra.mxu0 0.0
        %771 = vmatprep.subr.mxu0 0.0
        %772 = vmatpush2.msra.mxu0 0.0
        %773 = vmatprep.subr.mxu0 0.0
        %774 = vmatpush2.msra.mxu0 0.0
        %775 = vmatprep.subr.mxu0 0.0
        %776 = vmatpush2.msra.mxu0 0.0
        %777 = vmatprep.subr.mxu0 0.0
        %778 = vmatpush2.msra.mxu0 0.0
        %779 = vmatprep.subr.mxu0 0.0
        %780 = vmatpush2.msra.mxu0 0.0
        %781 = vmatprep.subr.mxu0 0.0
        %782 = vmatpush2.msra.mxu0 0.0
        %783 = vmatprep.subr.mxu0 0.0
        %784 = vmatpush2.msra.mxu0 0.0
        %785 = vmatprep.subr.mxu0 0.0
        %786 = vmatpush2.msra.mxu0 0.0
        %787 = vmatprep.subr.mxu0 0.0
        %788 = vmatpush2.msra.mxu0 0.0
        %789 = vmatprep.subr.mxu0 0.0
        %790 = vmatpush2.msra.mxu0 0.0
        %791 = vmatprep.subr.mxu0 0.0
        %792 = vmatpush2.msra.mxu0 0.0
        %793 = vmatprep.subr.mxu0 0.0
        %794 = vmatpush2.msra.mxu0 0.0
        %795 = vmatprep.subr.mxu0 0.0
        %796 = vmatpush2.msra.mxu0 0.0
        %797 = vmatprep.subr.mxu0 0.0
        %798 = vmatpush2.msra.mxu0 0.0
        %799 = vmatprep.subr.mxu0 0.0
        %800 = vmatpush2.msra.mxu0 0.0
        %801 = vmatprep.mubr.f32.mxu0 0.0
        %802 = vmatmul.mubr.f32.gmra.mxu0 %v732
        %v803 = vpop.f32.mrf.mxu0
        %v804 = vadd.f32 0.0, %v803
        %v805 = vpop.f32.mrf.mxu0
        %v806 = vadd.f32 0.0, %v805
        %807 = vmatprep.mubr.f32.mxu0 0.0
        %808 = vmatmul.mubr.f32.gmra.mxu0 %v735
        %v809 = vpop.f32.mrf.mxu0
        %v810 = vadd.f32 0.0, %v809
        %v811 = vpop.f32.mrf.mxu0
        %v812 = vadd.f32 0.0, %v811
        %813 = vdwg.mxu0
        %814 = vmatprep.subr.mxu0 0.0
        %815 = vmatpush1.msra.mxu0 0.0
        %816 = vmatprep.subr.mxu0 0.0
        %817 = vmatpush1.msra.mxu0 0.0
        %818 = vmatprep.subr.mxu0 0.0
        %819 = vmatpush1.msra.mxu0 0.0
        %820 = vmatprep.subr.mxu0 0.0
        %821 = vmatpush1.msra.mxu0 0.0
        %822 = vmatprep.subr.mxu0 0.0
        %823 = vmatpush1.msra.mxu0 0.0
        %824 = vmatprep.subr.mxu0 0.0
        %825 = vmatpush1.msra.mxu0 0.0
        %826 = vmatprep.subr.mxu0 0.0
        %827 = vmatpush1.msra.mxu0 0.0
        %828 = vmatprep.subr.mxu0 0.0
        %829 = vmatpush1.msra.mxu0 0.0
        %830 = vmatprep.subr.mxu0 0.0
        %831 = vmatpush1.msra.mxu0 0.0
        %832 = vmatprep.subr.mxu0 0.0
        %833 = vmatpush1.msra.mxu0 0.0
        %834 = vmatprep.subr.mxu0 0.0
        %835 = vmatpush1.msra.mxu0 0.0
        %836 = vmatprep.subr.mxu0 0.0
        %837 = vmatpush1.msra.mxu0 0.0
        %838 = vmatprep.subr.mxu0 0.0
        %839 = vmatpush1.msra.mxu0 0.0
        %840 = vmatprep.subr.mxu0 0.0
        %841 = vmatpush1.msra.mxu0 0.0
        %842 = vmatprep.subr.mxu0 %v723
        %843 = vmatpush1.msra.mxu0 %v722
        %844 = vmatprep.subr.mxu0 %v715
        %845 = vmatpush1.msra.mxu0 %v714
        %846 = vmatprep.subr.mxu0 0.0
        %847 = vmatpush2.msra.mxu0 0.0
        %848 = vmatprep.subr.mxu0 0.0
        %849 = vmatpush2.msra.mxu0 0.0
        %850 = vmatprep.subr.mxu0 0.0
        %851 = vmatpush2.msra.mxu0 0.0
        %852 = vmatprep.subr.mxu0 0.0
        %853 = vmatpush2.msra.mxu0 0.0
        %854 = vmatprep.subr.mxu0 0.0
        %855 = vmatpush2.msra.mxu0 0.0
        %856 = vmatprep.subr.mxu0 0.0
        %857 = vmatpush2.msra.mxu0 0.0
        %858 = vmatprep.subr.mxu0 0.0
        %859 = vmatpush2.msra.mxu0 0.0
        %860 = vmatprep.subr.mxu0 0.0
        %861 = vmatpush2.msra.mxu0 0.0
        %862 = vmatprep.subr.mxu0 0.0
        %863 = vmatpush2.msra.mxu0 0.0
        %864 = vmatprep.subr.mxu0 0.0
        %865 = vmatpush2.msra.mxu0 0.0
        %866 = vmatprep.subr.mxu0 0.0
        %867 = vmatpush2.msra.mxu0 0.0
        %868 = vmatprep.subr.mxu0 0.0
        %869 = vmatpush2.msra.mxu0 0.0
        %870 = vmatprep.subr.mxu0 0.0
        %871 = vmatpush2.msra.mxu0 0.0
        %872 = vmatprep.subr.mxu0 0.0
        %873 = vmatpush2.msra.mxu0 0.0
        %874 = vmatprep.subr.mxu0 0.0
        %875 = vmatpush2.msra.mxu0 0.0
        %876 = vmatprep.subr.mxu0 0.0
        %877 = vmatpush2.msra.mxu0 0.0
        %878 = vmatprep.mubr.f32.mxu0 0.0
        %879 = vmatmul.mubr.f32.gmra.mxu0 %v732
        %v880 = vpop.f32.mrf.mxu0
        %v881 = vadd.f32 0.0, %v880
        %v882 = vpop.f32.mrf.mxu0
        %v883 = vadd.f32 0.0, %v882
        %884 = vmatprep.mubr.f32.mxu0 0.0
        %885 = vmatmul.mubr.f32.gmra.mxu0 %v735
        %v886 = vpop.f32.mrf.mxu0
        %v887 = vadd.f32 0.0, %v886
        %v888 = vpop.f32.mrf.mxu0
        %v889 = vadd.f32 0.0, %v888
        %890 = vdwg.mxu0
        %891 = vmatprep.subr.mxu0 0.0
        %892 = vmatpush1.msra.mxu0 0.0
        %893 = vmatprep.subr.mxu0 0.0
        %894 = vmatpush1.msra.mxu0 0.0
        %895 = vmatprep.subr.mxu0 0.0
        %896 = vmatpush1.msra.mxu0 0.0
        %897 = vmatprep.subr.mxu0 0.0
        %898 = vmatpush1.msra.mxu0 0.0
        %899 = vmatprep.subr.mxu0 0.0
        %900 = vmatpush1.msra.mxu0 0.0
        %901 = vmatprep.subr.mxu0 0.0
        %902 = vmatpush1.msra.mxu0 0.0
        %903 = vmatprep.subr.mxu0 0.0
        %904 = vmatpush1.msra.mxu0 0.0
        %905 = vmatprep.subr.mxu0 0.0
        %906 = vmatpush1.msra.mxu0 0.0
        %907 = vmatprep.subr.mxu0 0.0
        %908 = vmatpush1.msra.mxu0 0.0
        %909 = vmatprep.subr.mxu0 0.0
        %910 = vmatpush1.msra.mxu0 0.0
        %911 = vmatprep.subr.mxu0 0.0
        %912 = vmatpush1.msra.mxu0 0.0
        %913 = vmatprep.subr.mxu0 0.0
        %914 = vmatpush1.msra.mxu0 0.0
        %915 = vmatprep.subr.mxu0 0.0
        %916 = vmatpush1.msra.mxu0 0.0
        %917 = vmatprep.subr.mxu0 0.0
        %918 = vmatpush1.msra.mxu0 0.0
        %919 = vmatprep.subr.mxu0 %v725
        %920 = vmatpush1.msra.mxu0 %v724
        %921 = vmatprep.subr.mxu0 %v717
        %922 = vmatpush1.msra.mxu0 %v716
        %923 = vmatprep.subr.mxu0 0.0
        %924 = vmatpush2.msra.mxu0 0.0
        %925 = vmatprep.subr.mxu0 0.0
        %926 = vmatpush2.msra.mxu0 0.0
        %927 = vmatprep.subr.mxu0 0.0
        %928 = vmatpush2.msra.mxu0 0.0
        %929 = vmatprep.subr.mxu0 0.0
        %930 = vmatpush2.msra.mxu0 0.0
        %931 = vmatprep.subr.mxu0 0.0
        %932 = vmatpush2.msra.mxu0 0.0
        %933 = vmatprep.subr.mxu0 0.0
        %934 = vmatpush2.msra.mxu0 0.0
        %935 = vmatprep.subr.mxu0 0.0
        %936 = vmatpush2.msra.mxu0 0.0
        %937 = vmatprep.subr.mxu0 0.0
        %938 = vmatpush2.msra.mxu0 0.0
        %939 = vmatprep.subr.mxu0 0.0
        %940 = vmatpush2.msra.mxu0 0.0
        %941 = vmatprep.subr.mxu0 0.0
        %942 = vmatpush2.msra.mxu0 0.0
        %943 = vmatprep.subr.mxu0 0.0
        %944 = vmatpush2.msra.mxu0 0.0
        %945 = vmatprep.subr.mxu0 0.0
        %946 = vmatpush2.msra.mxu0 0.0
        %947 = vmatprep.subr.mxu0 0.0
        %948 = vmatpush2.msra.mxu0 0.0
        %949 = vmatprep.subr.mxu0 0.0
        %950 = vmatpush2.msra.mxu0 0.0
        %951 = vmatprep.subr.mxu0 0.0
        %952 = vmatpush2.msra.mxu0 0.0
        %953 = vmatprep.subr.mxu0 0.0
        %954 = vmatpush2.msra.mxu0 0.0
        %955 = vmatprep.mubr.f32.mxu0 0.0
        %956 = vmatmul.mubr.f32.gmra.mxu0 %v732
        %v957 = vpop.f32.mrf.mxu0
        %v958 = vadd.f32 0.0, %v957
        %v959 = vpop.f32.mrf.mxu0
        %v960 = vadd.f32 0.0, %v959
        %961 = vmatprep.mubr.f32.mxu0 0.0
        %962 = vmatmul.mubr.f32.gmra.mxu0 %v735
        %v963 = vpop.f32.mrf.mxu0
        %v964 = vadd.f32 0.0, %v963
        %v965 = vpop.f32.mrf.mxu0
        %v966 = vadd.f32 0.0, %v965
        %967 = vdwg.mxu0
        %968 = vmatprep.subr.mxu0 0.0
        %969 = vmatpush1.msra.mxu0 0.0
        %970 = vmatprep.subr.mxu0 0.0
        %971 = vmatpush1.msra.mxu0 0.0
        %972 = vmatprep.subr.mxu0 0.0
        %973 = vmatpush1.msra.mxu0 0.0
        %974 = vmatprep.subr.mxu0 0.0
        %975 = vmatpush1.msra.mxu0 0.0
        %976 = vmatprep.subr.mxu0 0.0
        %977 = vmatpush1.msra.mxu0 0.0
        %978 = vmatprep.subr.mxu0 0.0
        %979 = vmatpush1.msra.mxu0 0.0
        %980 = vmatprep.subr.mxu0 0.0
        %981 = vmatpush1.msra.mxu0 0.0
        %982 = vmatprep.subr.mxu0 0.0
        %983 = vmatpush1.msra.mxu0 0.0
        %984 = vmatprep.subr.mxu0 0.0
        %985 = vmatpush1.msra.mxu0 0.0
        %986 = vmatprep.subr.mxu0 0.0
        %987 = vmatpush1.msra.mxu0 0.0
        %988 = vmatprep.subr.mxu0 0.0
        %989 = vmatpush1.msra.mxu0 0.0
        %990 = vmatprep.subr.mxu0 0.0
        %991 = vmatpush1.msra.mxu0 0.0
        %992 = vmatprep.subr.mxu0 0.0
        %993 = vmatpush1.msra.mxu0 0.0
        %994 = vmatprep.subr.mxu0 0.0
        %995 = vmatpush1.msra.mxu0 0.0
        %996 = vmatprep.subr.mxu0 %v727
        %997 = vmatpush1.msra.mxu0 %v726
        %998 = vmatprep.subr.mxu0 %v719
        %999 = vmatpush1.msra.mxu0 %v718
        %1000 = vmatprep.subr.mxu0 0.0
        %1001 = vmatpush2.msra.mxu0 0.0
        %1002 = vmatprep.subr.mxu0 0.0
        %1003 = vmatpush2.msra.mxu0 0.0
        %1004 = vmatprep.subr.mxu0 0.0
        %1005 = vmatpush2.msra.mxu0 0.0
        %1006 = vmatprep.subr.mxu0 0.0
        %1007 = vmatpush2.msra.mxu0 0.0
        %1008 = vmatprep.subr.mxu0 0.0
        %1009 = vmatpush2.msra.mxu0 0.0
        %1010 = vmatprep.subr.mxu0 0.0
        %1011 = vmatpush2.msra.mxu0 0.0
        %1012 = vmatprep.subr.mxu0 0.0
        %1013 = vmatpush2.msra.mxu0 0.0
        %1014 = vmatprep.subr.mxu0 0.0
        %1015 = vmatpush2.msra.mxu0 0.0
        %1016 = vmatprep.subr.mxu0 0.0
        %1017 = vmatpush2.msra.mxu0 0.0
        %1018 = vmatprep.subr.mxu0 0.0
        %1019 = vmatpush2.msra.mxu0 0.0
        %1020 = vmatprep.subr.mxu0 0.0
        %1021 = vmatpush2.msra.mxu0 0.0
        %1022 = vmatprep.subr.mxu0 0.0
        %1023 = vmatpush2.msra.mxu0 0.0
        %1024 = vmatprep.subr.mxu0 0.0
        %1025 = vmatpush2.msra.mxu0 0.0
        %1026 = vmatprep.subr.mxu0 0.0
        %1027 = vmatpush2.msra.mxu0 0.0
        %1028 = vmatprep.subr.mxu0 0.0
        %1029 = vmatpush2.msra.mxu0 0.0
        %1030 = vmatprep.subr.mxu0 0.0
        %1031 = vmatpush2.msra.mxu0 0.0
        %1032 = vmatprep.mubr.f32.mxu0 0.0
        %1033 = vmatmul.mubr.f32.gmra.mxu0 %v732
        %v1034 = vpop.f32.mrf.mxu0
        %v1035 = vadd.f32 0.0, %v1034
        %v1036 = vpop.f32.mrf.mxu0
        %v1037 = vadd.f32 0.0, %v1036
        %1038 = vmatprep.mubr.f32.mxu0 0.0
        %1039 = vmatmul.mubr.f32.gmra.mxu0 %v735
        %v1040 = vpop.f32.mrf.mxu0
        %v1041 = vadd.f32 0.0, %v1040
        %v1042 = vpop.f32.mrf.mxu0
        %v1043 = vadd.f32 0.0, %v1042
        %1044 = vdwg.mxu0
        %v1045 = vlaneseq
        %v1046 = vand.u32 %v1045, 127
        %v1047 = vadd.s32 %v1046, 128
        %v1048 = vadd.s32 %v1046, 256
        %v1049 = vadd.s32 %v1046, 384
        %v1050 = vadd.s32 %v1046, 512
        %v1051 = vadd.s32 %v1046, 640
        %v1052 = vadd.s32 %v1046, 768
        %v1053 = vadd.s32 %v1046, 896
        %vm1054 = vcmp.lt.s32.totalorder %v1046, 0
        %v1055 = vsub.s32 0, %v1046
        %v1056 = vsel %vm1054, %v1055, %v1046
        %v1057 = vshrl.u32 %v1056, 2
        %v1058 = vand.u32 %v1056, 3
        %v1059 = vsub.s32 0, %v1058
        %v1060 = vsel %vm1054, %v1059, %v1058
        %vm1061 = vcmp.lt.s32.totalorder %v1047, 0
        %v1062 = vsub.s32 0, %v1047
        %v1063 = vsel %vm1061, %v1062, %v1047
        %v1064 = vshrl.u32 %v1063, 2
        %v1065 = vand.u32 %v1063, 3
        %v1066 = vsub.s32 0, %v1065
        %v1067 = vsel %vm1061, %v1066, %v1065
        %vm1068 = vcmp.lt.s32.totalorder %v1048, 0
        %v1069 = vsub.s32 0, %v1048
        %v1070 = vsel %vm1068, %v1069, %v1048
        %v1071 = vshrl.u32 %v1070, 2
        %v1072 = vand.u32 %v1070, 3
        %v1073 = vsub.s32 0, %v1072
        %v1074 = vsel %vm1068, %v1073, %v1072
        %vm1075 = vcmp.lt.s32.totalorder %v1049, 0
        %v1076 = vsub.s32 0, %v1049
        %v1077 = vsel %vm1075, %v1076, %v1049
        %v1078 = vshrl.u32 %v1077, 2
        %v1079 = vand.u32 %v1077, 3
        %v1080 = vsub.s32 0, %v1079
        %v1081 = vsel %vm1075, %v1080, %v1079
        %vm1082 = vcmp.lt.s32.totalorder %v1050, 0
        %v1083 = vsub.s32 0, %v1050
        %v1084 = vsel %vm1082, %v1083, %v1050
        %v1085 = vshrl.u32 %v1084, 2
        %v1086 = vand.u32 %v1084, 3
        %v1087 = vsub.s32 0, %v1086
        %v1088 = vsel %vm1082, %v1087, %v1086
        %vm1089 = vcmp.lt.s32.totalorder %v1051, 0
        %v1090 = vsub.s32 0, %v1051
        %v1091 = vsel %vm1089, %v1090, %v1051
        %v1092 = vshrl.u32 %v1091, 2
        %v1093 = vand.u32 %v1091, 3
        %v1094 = vsub.s32 0, %v1093
        %v1095 = vsel %vm1089, %v1094, %v1093
        %vm1096 = vcmp.lt.s32.totalorder %v1052, 0
        %v1097 = vsub.s32 0, %v1052
        %v1098 = vsel %vm1096, %v1097, %v1052
        %v1099 = vshrl.u32 %v1098, 2
        %v1100 = vand.u32 %v1098, 3
        %v1101 = vsub.s32 0, %v1100
        %v1102 = vsel %vm1096, %v1101, %v1100
        %vm1103 = vcmp.lt.s32.totalorder %v1053, 0
        %v1104 = vsub.s32 0, %v1053
        %v1105 = vsel %vm1103, %v1104, %v1053
        %v1106 = vshrl.u32 %v1105, 2
        %v1107 = vand.u32 %v1105, 3
        %v1108 = vsub.s32 0, %v1107
        %v1109 = vsel %vm1103, %v1108, %v1107
        %vm1110 = vcmp.ne.s32.totalorder %v1060, 0
        %vm1111 = vcmp.ne.s32.totalorder %v1067, 0
        %vm1112 = vcmp.ne.s32.totalorder %v1074, 0
        %vm1113 = vcmp.ne.s32.totalorder %v1081, 0
        %vm1114 = vcmp.ne.s32.totalorder %v1088, 0
        %vm1115 = vcmp.ne.s32.totalorder %v1095, 0
        %vm1116 = vcmp.ne.s32.totalorder %v1102, 0
        %vm1117 = vcmp.ne.s32.totalorder %v1109, 0
        %vm1118 = vcmp.lt.s32.totalorder %v1060, 0
        %vm1119 = vcmp.lt.s32.totalorder %v1067, 0
        %vm1120 = vcmp.lt.s32.totalorder %v1074, 0
        %vm1121 = vcmp.lt.s32.totalorder %v1081, 0
        %vm1122 = vcmp.lt.s32.totalorder %v1088, 0
        %vm1123 = vcmp.lt.s32.totalorder %v1095, 0
        %vm1124 = vcmp.lt.s32.totalorder %v1102, 0
        %vm1125 = vcmp.lt.s32.totalorder %v1109, 0
        %vm1126 = vmand %vm1118, %vm1110
        %vm1127 = vmand %vm1119, %vm1111
        %vm1128 = vmand %vm1120, %vm1112
        %vm1129 = vmand %vm1121, %vm1113
        %vm1130 = vmand %vm1122, %vm1114
        %vm1131 = vmand %vm1123, %vm1115
        %vm1132 = vmand %vm1124, %vm1116
        %vm1133 = vmand %vm1125, %vm1117
        %v1134 = vadd.s32 %v1060, 4
        %v1135 = vadd.s32 %v1067, 4
        %v1136 = vadd.s32 %v1074, 4
        %v1137 = vadd.s32 %v1081, 4
        %v1138 = vadd.s32 %v1088, 4
        %v1139 = vadd.s32 %v1095, 4
        %v1140 = vadd.s32 %v1102, 4
        %v1141 = vadd.s32 %v1109, 4
        %v1142 = vsel %vm1126, %v1134, %v1060
        %v1143 = vsel %vm1127, %v1135, %v1067
        %v1144 = vsel %vm1128, %v1136, %v1074
        %v1145 = vsel %vm1129, %v1137, %v1081
        %v1146 = vsel %vm1130, %v1138, %v1088
        %v1147 = vsel %vm1131, %v1139, %v1095
        %v1148 = vsel %vm1132, %v1140, %v1102
        %v1149 = vsel %vm1133, %v1141, %v1109
        %vm1150 = vcmp.eq.s32.totalorder %v1142, 0
        %vm1151 = vcmp.eq.s32.totalorder %v1143, 0
        %vm1152 = vcmp.eq.s32.totalorder %v1144, 0
        %vm1153 = vcmp.eq.s32.totalorder %v1145, 0
        %vm1154 = vcmp.eq.s32.totalorder %v1146, 0
        %vm1155 = vcmp.eq.s32.totalorder %v1147, 0
        %vm1156 = vcmp.eq.s32.totalorder %v1148, 0
        %vm1157 = vcmp.eq.s32.totalorder %v1149, 0
        %v1158 = vsel %vm1150, 1, 0
        %v1159 = vsel %vm1151, 1, 0
        %v1160 = vsel %vm1152, 1, 0
        %v1161 = vsel %vm1153, 1, 0
        %v1162 = vsel %vm1154, 1, 0
        %v1163 = vsel %vm1155, 1, 0
        %v1164 = vsel %vm1156, 1, 0
        %v1165 = vsel %vm1157, 1, 0
        %vm1166 = vcmp.eq.s32.totalorder %v1158, 1
        %vm1167 = vcmp.eq.s32.totalorder %v1159, 1
        %vm1168 = vcmp.eq.s32.totalorder %v1160, 1
        %vm1169 = vcmp.eq.s32.totalorder %v1161, 1
        %vm1170 = vcmp.eq.s32.totalorder %v1162, 1
        %vm1171 = vcmp.eq.s32.totalorder %v1163, 1
        %vm1172 = vcmp.eq.s32.totalorder %v1164, 1
        %vm1173 = vcmp.eq.s32.totalorder %v1165, 1
        %v1174 = vsel %vm1166, %v804, 0.0
        %v1175 = vsel %vm1167, %v806, 0.0
        %v1176 = vsel %vm1168, %v881, 0.0
        %v1177 = vsel %vm1169, %v883, 0.0
        %v1178 = vsel %vm1170, %v958, 0.0
        %v1179 = vsel %vm1171, %v960, 0.0
        %v1180 = vsel %vm1172, %v1035, 0.0
        %v1181 = vsel %vm1173, %v1037, 0.0
        %vm1182 = vcmp.eq.s32.totalorder %v1142, 1
        %vm1183 = vcmp.eq.s32.totalorder %v1143, 1
        %vm1184 = vcmp.eq.s32.totalorder %v1144, 1
        %vm1185 = vcmp.eq.s32.totalorder %v1145, 1
        %vm1186 = vcmp.eq.s32.totalorder %v1146, 1
        %vm1187 = vcmp.eq.s32.totalorder %v1147, 1
        %vm1188 = vcmp.eq.s32.totalorder %v1148, 1
        %vm1189 = vcmp.eq.s32.totalorder %v1149, 1
        %v1190 = vsel %vm1182, 1, 0
        %v1191 = vsel %vm1183, 1, 0
        %v1192 = vsel %vm1184, 1, 0
        %v1193 = vsel %vm1185, 1, 0
        %v1194 = vsel %vm1186, 1, 0
        %v1195 = vsel %vm1187, 1, 0
        %v1196 = vsel %vm1188, 1, 0
        %v1197 = vsel %vm1189, 1, 0
        %vm1198 = vcmp.eq.s32.totalorder %v1190, 1
        %vm1199 = vcmp.eq.s32.totalorder %v1191, 1
        %vm1200 = vcmp.eq.s32.totalorder %v1192, 1
        %vm1201 = vcmp.eq.s32.totalorder %v1193, 1
        %vm1202 = vcmp.eq.s32.totalorder %v1194, 1
        %vm1203 = vcmp.eq.s32.totalorder %v1195, 1
        %vm1204 = vcmp.eq.s32.totalorder %v1196, 1
        %vm1205 = vcmp.eq.s32.totalorder %v1197, 1
        %v1214 = vrot.slane %v1174, 4
        %v1215 = vrot.slane %v1175, 4
        %v1216 = vrot.slane %v1176, 4
        %v1217 = vrot.slane %v1177, 4
        %v1218 = vrot.slane %v1178, 4
        %v1219 = vrot.slane %v1179, 4
        %v1220 = vrot.slane %v1180, 4
        %v1221 = vrot.slane %v1181, 4
        %v1230 = vsel %vm1198, %v804, %v1214
        %v1231 = vsel %vm1199, %v806, %v1215
        %v1232 = vsel %vm1200, %v881, %v1216
        %v1233 = vsel %vm1201, %v883, %v1217
        %v1234 = vsel %vm1202, %v958, %v1218
        %v1235 = vsel %vm1203, %v960, %v1219
        %v1236 = vsel %vm1204, %v1035, %v1220
        %v1237 = vsel %vm1205, %v1037, %v1221
        %vm1238 = vcmp.eq.s32.totalorder %v1142, 2
        %vm1239 = vcmp.eq.s32.totalorder %v1143, 2
        %vm1240 = vcmp.eq.s32.totalorder %v1144, 2
        %vm1241 = vcmp.eq.s32.totalorder %v1145, 2
        %vm1242 = vcmp.eq.s32.totalorder %v1146, 2
        %vm1243 = vcmp.eq.s32.totalorder %v1147, 2
        %vm1244 = vcmp.eq.s32.totalorder %v1148, 2
        %vm1245 = vcmp.eq.s32.totalorder %v1149, 2
        %v1246 = vsel %vm1238, 1, 0
        %v1247 = vsel %vm1239, 1, 0
        %v1248 = vsel %vm1240, 1, 0
        %v1249 = vsel %vm1241, 1, 0
        %v1250 = vsel %vm1242, 1, 0
        %v1251 = vsel %vm1243, 1, 0
        %v1252 = vsel %vm1244, 1, 0
        %v1253 = vsel %vm1245, 1, 0
        %vm1254 = vcmp.eq.s32.totalorder %v1246, 1
        %vm1255 = vcmp.eq.s32.totalorder %v1247, 1
        %vm1256 = vcmp.eq.s32.totalorder %v1248, 1
        %vm1257 = vcmp.eq.s32.totalorder %v1249, 1
        %vm1258 = vcmp.eq.s32.totalorder %v1250, 1
        %vm1259 = vcmp.eq.s32.totalorder %v1251, 1
        %vm1260 = vcmp.eq.s32.totalorder %v1252, 1
        %vm1261 = vcmp.eq.s32.totalorder %v1253, 1
        %v1270 = vrot.slane %v1230, 4
        %v1271 = vrot.slane %v1231, 4
        %v1272 = vrot.slane %v1232, 4
        %v1273 = vrot.slane %v1233, 4
        %v1274 = vrot.slane %v1234, 4
        %v1275 = vrot.slane %v1235, 4
        %v1276 = vrot.slane %v1236, 4
        %v1277 = vrot.slane %v1237, 4
        %v1286 = vsel %vm1254, %v810, %v1270
        %v1287 = vsel %vm1255, %v812, %v1271
        %v1288 = vsel %vm1256, %v887, %v1272
        %v1289 = vsel %vm1257, %v889, %v1273
        %v1290 = vsel %vm1258, %v964, %v1274
        %v1291 = vsel %vm1259, %v966, %v1275
        %v1292 = vsel %vm1260, %v1041, %v1276
        %v1293 = vsel %vm1261, %v1043, %v1277
        %vm1294 = vcmp.eq.s32.totalorder %v1142, 3
        %vm1295 = vcmp.eq.s32.totalorder %v1143, 3
        %vm1296 = vcmp.eq.s32.totalorder %v1144, 3
        %vm1297 = vcmp.eq.s32.totalorder %v1145, 3
        %vm1298 = vcmp.eq.s32.totalorder %v1146, 3
        %vm1299 = vcmp.eq.s32.totalorder %v1147, 3
        %vm1300 = vcmp.eq.s32.totalorder %v1148, 3
        %vm1301 = vcmp.eq.s32.totalorder %v1149, 3
        %v1302 = vsel %vm1294, 1, 0
        %v1303 = vsel %vm1295, 1, 0
        %v1304 = vsel %vm1296, 1, 0
        %v1305 = vsel %vm1297, 1, 0
        %v1306 = vsel %vm1298, 1, 0
        %v1307 = vsel %vm1299, 1, 0
        %v1308 = vsel %vm1300, 1, 0
        %v1309 = vsel %vm1301, 1, 0
        %vm1310 = vcmp.eq.s32.totalorder %v1302, 1
        %vm1311 = vcmp.eq.s32.totalorder %v1303, 1
        %vm1312 = vcmp.eq.s32.totalorder %v1304, 1
        %vm1313 = vcmp.eq.s32.totalorder %v1305, 1
        %vm1314 = vcmp.eq.s32.totalorder %v1306, 1
        %vm1315 = vcmp.eq.s32.totalorder %v1307, 1
        %vm1316 = vcmp.eq.s32.totalorder %v1308, 1
        %vm1317 = vcmp.eq.s32.totalorder %v1309, 1
        %v1326 = vrot.slane %v1286, 4
        %v1327 = vrot.slane %v1287, 4
        %v1328 = vrot.slane %v1288, 4
        %v1329 = vrot.slane %v1289, 4
        %v1330 = vrot.slane %v1290, 4
        %v1331 = vrot.slane %v1291, 4
        %v1332 = vrot.slane %v1292, 4
        %v1333 = vrot.slane %v1293, 4
        %v1342 = vsel %vm1310, %v810, %v1326
        %v1343 = vsel %vm1311, %v812, %v1327
        %v1344 = vsel %vm1312, %v887, %v1328
        %v1345 = vsel %vm1313, %v889, %v1329
        %v1346 = vsel %vm1314, %v964, %v1330
        %v1347 = vsel %vm1315, %v966, %v1331
        %v1348 = vsel %vm1316, %v1041, %v1332
        %v1349 = vsel %vm1317, %v1043, %v1333
        %v1350 = vld [vmem:[%s6] sm:$0xf]
        %1352 = vset.pattern.permute.xlu0 0
        %1353 = vperm.xlu0 %1352, %v1350
        %v1354 = vpop.permute.xlu0 %1353
        %v1355 = vrot.slane %v1354, 4
        %v1357 = vadd.f32 %v1342, %v1355
        %v1358 = vadd.f32 %v1343, %v1355
        %v1359 = vadd.f32 %v1344, %v1355
        %v1360 = vadd.f32 %v1345, %v1355
        %v1361 = vadd.f32 %v1346, %v1355
        %v1362 = vadd.f32 %v1347, %v1355
        %v1363 = vadd.f32 %v1348, %v1355
        %v1364 = vadd.f32 %v1349, %v1355
        %v1373 = vcombine.high %v1357, %v1358
        %v1374 = vcombine.high %v1359, %v1360
        %v1375 = vcombine.high %v1361, %v1362
        %v1376 = vcombine.high %v1363, %v1364
        %1381 = vst [vmem:[%s294] sm:$0xff] %v1373
        %1382 = vst [vmem:[%s294 + $0x8] sm:$0xff] %v1374
        %1383 = vst [vmem:[%s294 + $0x10] sm:$0xff] %v1375
        %1384 = vst [vmem:[%s294 + $0x18] sm:$0xff] %v1376
        %s1385 = sand.u32 %s197, 1
        %s1386 = scalar_lea.sflag [#allocation3], %s1385
        %s1387 = sand.u32 %s197, 1
        %s1388 = smul.addr %s1387, 32
        %s1389 = scalar_lea.vmem [#allocation2], %s1388
        // Predicated region
        $region49: #{tpu_custom_call.1} parent=47 // pred_check
          %p1390 = pneg %p207
        $region50: #{tpu_custom_call.1} parent=47 // pred_check_branch
          %1392 = sbr.rel (%p1390) target = $region52
        $region51: #{tpu_custom_call.1} parent=47 // pred_region
          %s1393 = smul.u32 8, %s26
          %s1395 = ssub.s32 512, 512
          %1396 = vsyncadd %s1386, %s1395
          %s1397 = smul.addr %s25, 8
          %s1398 = sadd.s32 %s1393, %s1397
          %s1399 = smul.addr %s1398, 64
          %s1400 = scalar_lea.hbm %s7, %s1399
          %s1402 = sshll.u32 %s1389, 4
          %s1403 = int_to_ptr.vmem [resolvable:$true] %s1402
          %1405 = dma.vmem_to_hbm [thread:$0]  %s1403, 512, %s1400, %s1386
        $region52: #{tpu_custom_call.1} parent=47 // pred_fallthru
          _
      $region48: #{tpu_custom_call.1} parent=5 // pred_fallthru
        _
      %p1406 = scmp.le.s32.totalorder 2, %s16
      // Predicated region
      $region53: #{tpu_custom_call.1} parent=5 // pred_check
        %p1407 = pneg %p1406
      $region54: #{tpu_custom_call.1} parent=5 // pred_check_branch
        %1409 = sbr.rel (%p1407) target = $region56
      $region55: #{tpu_custom_call.1} parent=5 // pred_region
        %s1410 = ssub.s32 %s16, 2
        // Predicated region
        $region57: #{tpu_custom_call.1} parent=55 // pred_check
          %p1411 = pneg %p213
        $region58: #{tpu_custom_call.1} parent=55 // pred_check_branch
          %1413 = sbr.rel (%p1411) target = $region60
        $region59: #{tpu_custom_call.1} parent=55 // pred_region
          %s1414 = sand.u32 %s198, 1
          %s1415 = scalar_lea.sflag [#allocation3], %s1414
          %s1416 = sand.u32 %s198, 1
          %s1417 = smul.addr %s1416, 32
          %s1418 = scalar_lea.vmem [#allocation2], %s1417
          %1419 = dma.done %s1415, 512
        $region60: #{tpu_custom_call.1} parent=55 // pred_fallthru
          _
      $region56: #{tpu_custom_call.1} parent=5 // pred_fallthru
        _
    $region6: #{tpu_custom_call.1} parent=1 // loop_footer
      %s20 = sadd.s32 1, %s16
    $region7: #{tpu_custom_call.1} parent=1 // loop_footer_branch
      %15 = sbr.rel target = $region3
    $region8: #{tpu_custom_call.1} parent=1 // loop_exit
      _
    %1420 = vsyncpa [#allocation3], 1
    %s1421 = scalar_lea.sflag [#allocation3], 1
    %1422 = vsyncpa %s1421, 1

</llo_original>
